<compile_context>
chip_gen: v5e
topology: v5e:2x2
jax: 0.10.0
libtpu: 0.0.40
codegen_flags: <defaults>
</compile_context>

<pallas_src>
import jax
import jax.numpy as jnp
from jax import lax
from jax.experimental import pallas as pl
from jax.experimental.pallas import tpu as pltpu


def _round_up(n, m):
    return (n + m - 1) // m * m


def _lstm_linear_kernel(x_ref, wih_ref, whh_ref, b_ref, wlin_ref, blin_ref,
                        out_ref, g_sc, hseq_sc, h_sc, c_sc):
    """Full LSTM recurrence + linear head for one padded sequence.

    x_ref    : (seq, dim_p)          VMEM
    wih_ref  : (dim_p, 4*hid_p)      VMEM   fused gates, order i, f, o, g
    whh_ref  : (hid_p, 4*hid_p)      VMEM
    b_ref    : (1, 4*hid_p)          VMEM   (b_ih + b_hh, fused)
    wlin_ref : (hid_p, dim_p)        VMEM
    blin_ref : (1, dim_p)            VMEM
    out_ref  : (seq, dim_p)          VMEM
    g_sc     : (seq, 4*hid_p) f32    hoisted input projection
    hseq_sc  : (seq, hid_p)   f32    per-step hidden states
    h_sc/c_sc: (1, hid_p)     f32    recurrent state
    """
    seq = x_ref.shape[0]
    hid = h_sc.shape[1]

    # Hoisted input projection: one big MXU matmul + one bias add.
    g_sc[...] = (jnp.dot(x_ref[...], wih_ref[...],
                         preferred_element_type=jnp.float32)
                 + b_ref[...])

    # Zero initial state (PyTorch _init_hidden).
    h_sc[...] = jnp.zeros_like(h_sc)
    c_sc[...] = jnp.zeros_like(c_sc)

    def step(t, carry):
        h_prev = h_sc[...]                       # (1, hid_p)
        c_prev = c_sc[...]                       # (1, hid_p)

        # Single fused recurrent matmul on the serial critical path.
        gates = g_sc[pl.ds(t, 1), :] + jnp.dot(
            h_prev, whh_ref[...], preferred_element_type=jnp.float32)

        # Gate order i, f, o, g: one sigmoid over 3 contiguous blocks.
        ifo = jax.nn.sigmoid(gates[:, :3 * hid])
        g_g = jnp.tanh(gates[:, 3 * hid:])
        i_g = ifo[:, :hid]
        f_g = ifo[:, hid:2 * hid]
        o_g = ifo[:, 2 * hid:]

        c_new = f_g * c_prev + i_g * g_g
        h_new = o_g * jnp.tanh(c_new)

        c_sc[...] = c_new
        h_sc[...] = h_new
        hseq_sc[pl.ds(t, 1), :] = h_new
        return carry

    lax.fori_loop(0, seq, step, 0, unroll=True)

    # Linear head: one MXU matmul + one lane-dense full-tile store.
    out_ref[...] = (jnp.dot(hseq_sc[...], wlin_ref[...],
                            preferred_element_type=jnp.float32)
                    + blin_ref[...]).astype(out_ref.dtype)


def init_params_raw(key, dim, hidden):
    """PyTorch-style parameter init / layouts (gate order i, f, g, o)."""
    ks = jax.random.split(key, 6)
    bound = 1.0 / jnp.sqrt(hidden)
    u = lambda k, shape: jax.random.uniform(k, shape, jnp.float32, -bound, bound)
    return {
        "w_ih": u(ks[0], (4 * hidden, dim)),      # nn.LSTM weight_ih_l0
        "w_hh": u(ks[1], (4 * hidden, hidden)),   # nn.LSTM weight_hh_l0
        "b_ih": u(ks[2], (4 * hidden,)),
        "b_hh": u(ks[3], (4 * hidden,)),
        "w_lin": u(ks[4], (dim, hidden)),         # nn.Linear weight (out, in)
        "b_lin": u(ks[5], (dim,)),
    }


def prepare_params(raw, dim, hidden):
    """Fuse / reorder / transpose / zero-pad PyTorch params for the kernel."""
    dim_p = _round_up(dim, 128)
    hid_p = _round_up(hidden, 128)
    H = hidden

    w_ih = raw["w_ih"].reshape(4, H, dim)          # per-gate (out, in)
    w_hh = raw["w_hh"].reshape(4, H, H)
    b = (raw["b_ih"] + raw["b_hh"]).reshape(4, H)

    # Reorder gates i, f, g, o  ->  i, f, o, g (sigmoid gates contiguous).
    order = jnp.array([0, 1, 3, 2])
    w_ih, w_hh, b = w_ih[order], w_hh[order], b[order]

    def fuse(w_gate, in_dim, in_pad):
        # (4, H, in) -> (in_pad, 4*hid_p) with gate k in cols [k*hid_p, ...)
        w_t = jnp.transpose(w_gate, (0, 2, 1))                       # (4, in, H)
        w_t = jnp.pad(w_t, ((0, 0), (0, in_pad - in_dim), (0, hid_p - H)))
        return jnp.transpose(w_t, (1, 0, 2)).reshape(in_pad, 4 * hid_p)

    return {
        "w_ih": fuse(w_ih, dim, dim_p),                              # (dim_p, 4*hid_p)
        "w_hh": fuse(w_hh, H, hid_p),                                # (hid_p, 4*hid_p)
        "b": jnp.pad(b, ((0, 0), (0, hid_p - H))).reshape(1, 4 * hid_p),
        "w_lin": jnp.pad(raw["w_lin"].T,
                         ((0, hid_p - H), (0, dim_p - dim))),        # (hid_p, dim_p)
        "b_lin": jnp.pad(raw["b_lin"], (0, dim_p - dim)).reshape(1, dim_p),
        "dim_p": dim_p,
        "hid_p": hid_p,
    }


def composer_forward(chunk, params, dim):
    """chunk: (1, seq, dim) batch_first, batch == 1.  Returns (seq, dim)."""
    assert chunk.shape[0] == 1
    _, seq, d = chunk.shape
    assert d == dim
    dim_p, hid_p = params["dim_p"], params["hid_p"]

    x = jnp.pad(chunk[0], ((0, 0), (0, dim_p - dim)))   # (seq, dim_p)

    full = lambda shape: pl.BlockSpec(shape, lambda i: (0,) * len(shape))

    out = pl.pallas_call(
        _lstm_linear_kernel,
        out_shape=jax.ShapeDtypeStruct((seq, dim_p), jnp.float32),
        grid=(1,),
        in_specs=[
            full((seq, dim_p)),
            full((dim_p, 4 * hid_p)),
            full((hid_p, 4 * hid_p)),
            full((1, 4 * hid_p)),
            full((hid_p, dim_p)),
            full((1, dim_p)),
        ],
        out_specs=full((seq, dim_p)),
        scratch_shapes=[
            pltpu.VMEM((seq, 4 * hid_p), jnp.float32),   # hoisted gate projections
            pltpu.VMEM((seq, hid_p), jnp.float32),       # h_t history for the head
            pltpu.VMEM((1, hid_p), jnp.float32),         # h
            pltpu.VMEM((1, hid_p), jnp.float32),         # c
        ],
        compiler_params=pltpu.CompilerParams(
            dimension_semantics=("arbitrary",)),
    )(x, params["w_ih"], params["w_hh"], params["b"],
      params["w_lin"], params["b_lin"])

    return out[:, :dim]


def composer_reference(chunk, raw):
    """Pure-JAX reference matching PyTorch nn.LSTM + nn.Linear semantics."""
    x = chunk[0]                                  # (seq, dim)
    H = raw["w_hh"].shape[1]
    w_ih, w_hh = raw["w_ih"], raw["w_hh"]
    b = raw["b_ih"] + raw["b_hh"]

    def step(carry, x_t):
        h, c = carry
        gates = w_ih @ x_t + w_hh @ h + b        # (4H,), order i, f, g, o
        i = jax.nn.sigmoid(gates[0:H])
        f = jax.nn.sigmoid(gates[H:2 * H])
        g = jnp.tanh(gates[2 * H:3 * H])
        o = jax.nn.sigmoid(gates[3 * H:4 * H])
        c_new = f * c + i * g
        h_new = o * jnp.tanh(c_new)
        return (h_new, c_new), h_new

    _, hs = lax.scan(step, (jnp.zeros(H, jnp.float32),
                            jnp.zeros(H, jnp.float32)), x)
    return hs @ raw["w_lin"].T + raw["b_lin"][None, :]


if __name__ == "__main__":
    DIM, HIDDEN, SEQ = 93, 100, 8                 # module defaults: dim=93, hidden=100
    key = jax.random.PRNGKey(0)
    k_param, k_x = jax.random.split(key)

    raw = init_params_raw(k_param, DIM, HIDDEN)
    params = prepare_params(raw, DIM, HIDDEN)
    chunk = jax.random.normal(k_x, (1, SEQ, DIM), jnp.float32)

    # TODO(synk): the PyTorch module persists self.hidden across forward()
    # calls; here the state is zero-initialized per call (one forward pass).
    out = composer_forward(chunk, params, DIM)
    out = jax.block_until_ready(out)

    ref = composer_reference(chunk, raw)
    assert out.shape == (SEQ, DIM)
    assert jnp.allclose(out, ref, rtol=1e-4, atol=1e-4), "mismatch vs reference"

    print("KERNEL_OK")
</pallas_src>

<mosaic_0001>
module attributes {stable_mosaic.version = 11 : i64} {
  func.func @_lstm_linear_kernel(%arg0: i32, %arg1: memref<8x128xf32, #tpu.memory_space<vmem>>, %arg2: memref<128x512xf32, #tpu.memory_space<vmem>>, %arg3: memref<128x512xf32, #tpu.memory_space<vmem>>, %arg4: memref<1x512xf32, #tpu.memory_space<vmem>>, %arg5: memref<128x128xf32, #tpu.memory_space<vmem>>, %arg6: memref<1x128xf32, #tpu.memory_space<vmem>>, %arg7: memref<8x128xf32, #tpu.memory_space<vmem>>, %arg8: memref<8x512xf32, #tpu.memory_space<vmem>>, %arg9: memref<8x128xf32, #tpu.memory_space<vmem>>, %arg10: memref<1x128xf32, #tpu.memory_space<vmem>>, %arg11: memref<1x128xf32, #tpu.memory_space<vmem>>) attributes {dimension_semantics = [#tpu.dimension_semantics<arbitrary>], iteration_bounds = array<i64: 1>, scalar_prefetch = 0 : i64, scratch_operands = 4 : i64, tpu.core_type = #tpu.core_type<tc>, window_params = [{pipeline_mode = #tpu.pipeline_mode<synchronous>, transform_indices = @transform_0, window_bounds = array<i64: 8, 128>}, {pipeline_mode = #tpu.pipeline_mode<synchronous>, transform_indices = @transform_1, window_bounds = array<i64: 128, 512>}, {pipeline_mode = #tpu.pipeline_mode<synchronous>, transform_indices = @transform_2, window_bounds = array<i64: 128, 512>}, {pipeline_mode = #tpu.pipeline_mode<synchronous>, transform_indices = @transform_3, window_bounds = array<i64: 1, 512>}, {pipeline_mode = #tpu.pipeline_mode<synchronous>, transform_indices = @transform_4, window_bounds = array<i64: 128, 128>}, {pipeline_mode = #tpu.pipeline_mode<synchronous>, transform_indices = @transform_5, window_bounds = array<i64: 1, 128>}, {pipeline_mode = #tpu.pipeline_mode<synchronous>, transform_indices = @transform_6, window_bounds = array<i64: 8, 128>}]} {
    %c0 = arith.constant 0 : index
    %c0_0 = arith.constant 0 : index
    %0 = vector.load %arg1[%c0, %c0_0] : memref<8x128xf32, #tpu.memory_space<vmem>>, vector<8x128xf32>
    %c0_1 = arith.constant 0 : index
    %c0_2 = arith.constant 0 : index
    %1 = vector.load %arg2[%c0_1, %c0_2] : memref<128x512xf32, #tpu.memory_space<vmem>>, vector<128x512xf32>
    %cst = arith.constant dense<0.000000e+00> : vector<8x512xf32>
    %2 = tpu.matmul %0, %1, %cst {dimension_numbers = #tpu.dot_dimension_numbers<[1], [0], [0], [1], [0, 0, 1, 1], [], []>} : vector<8x128xf32>, vector<128x512xf32>, vector<8x512xf32> -> vector<8x512xf32>
    %c0_3 = arith.constant 0 : index
    %c0_4 = arith.constant 0 : index
    %3 = vector.load %arg4[%c0_3, %c0_4] : memref<1x512xf32, #tpu.memory_space<vmem>>, vector<1x512xf32>
    %4 = vector.broadcast %3 : vector<1x512xf32> to vector<8x512xf32>
    %5 = arith.addf %2, %4 : vector<8x512xf32>
    %c0_5 = arith.constant 0 : index
    %c0_6 = arith.constant 0 : index
    %6 = vector.load %arg8[%c0_5, %c0_6] : memref<8x512xf32, #tpu.memory_space<vmem>>, vector<8x512xf32>
    tpu.vector_store %arg8[%c0_5, %c0_6], %5 {strides = array<i32>} : memref<8x512xf32, #tpu.memory_space<vmem>>, vector<8x512xf32>,
    %cst_7 = arith.constant 0.000000e+00 : f32
    %7 = vector.broadcast %cst_7 : f32 to vector<1x128xf32>
    %c0_8 = arith.constant 0 : index
    %c0_9 = arith.constant 0 : index
    %8 = vector.load %arg10[%c0_8, %c0_9] : memref<1x128xf32, #tpu.memory_space<vmem>>, vector<1x128xf32>
    tpu.vector_store %arg10[%c0_8, %c0_9], %7 {strides = array<i32>} : memref<1x128xf32, #tpu.memory_space<vmem>>, vector<1x128xf32>,
    %cst_10 = arith.constant 0.000000e+00 : f32
    %9 = vector.broadcast %cst_10 : f32 to vector<1x128xf32>
    %c0_11 = arith.constant 0 : index
    %c0_12 = arith.constant 0 : index
    %10 = vector.load %arg11[%c0_11, %c0_12] : memref<1x128xf32, #tpu.memory_space<vmem>>, vector<1x128xf32>
    tpu.vector_store %arg11[%c0_11, %c0_12], %9 {strides = array<i32>} : memref<1x128xf32, #tpu.memory_space<vmem>>, vector<1x128xf32>,
    %c0_i32 = arith.constant 0 : i32
    %c0_13 = arith.constant 0 : index
    %c0_14 = arith.constant 0 : index
    %11 = vector.load %arg10[%c0_13, %c0_14] : memref<1x128xf32, #tpu.memory_space<vmem>>, vector<1x128xf32>
    %c0_15 = arith.constant 0 : index
    %c0_16 = arith.constant 0 : index
    %12 = vector.load %arg11[%c0_15, %c0_16] : memref<1x128xf32, #tpu.memory_space<vmem>>, vector<1x128xf32>
    %13 = arith.index_cast %c0_i32 : i32 to index
    %c0_17 = arith.constant 0 : index
    %14 = vector.load %arg8[%13, %c0_17] : memref<8x512xf32, #tpu.memory_space<vmem>>, vector<1x512xf32>
    %c0_18 = arith.constant 0 : index
    %c0_19 = arith.constant 0 : index
    %15 = vector.load %arg3[%c0_18, %c0_19] : memref<128x512xf32, #tpu.memory_space<vmem>>, vector<128x512xf32>
    %cst_20 = arith.constant dense<0.000000e+00> : vector<1x512xf32>
    %16 = tpu.matmul %11, %15, %cst_20 {dimension_numbers = #tpu.dot_dimension_numbers<[1], [0], [0], [1], [0, 0, 1, 1], [], []>} : vector<1x128xf32>, vector<128x512xf32>, vector<1x512xf32> -> vector<1x512xf32>
    %17 = arith.addf %14, %16 : vector<1x512xf32>
    %18 = vector.extract_strided_slice %17 {offsets = [0, 0], sizes = [1, 384], strides = [1, 1]} : vector<1x512xf32> to vector<1x384xf32>
    %19 = arith.negf %18 : vector<1x384xf32>
    %20 = math.exp %19 : vector<1x384xf32>
    %cst_21 = arith.constant 1.000000e+00 : f32
    %21 = vector.broadcast %cst_21 : f32 to vector<1x384xf32>
    %22 = arith.addf %21, %20 : vector<1x384xf32>
    %23 = arith.divf %21, %22 : vector<1x384xf32>
    %24 = vector.extract_strided_slice %17 {offsets = [0, 384], sizes = [1, 128], strides = [1, 1]} : vector<1x512xf32> to vector<1x128xf32>
    %25 = math.tanh %24 : vector<1x128xf32>
    %26 = vector.extract_strided_slice %23 {offsets = [0, 0], sizes = [1, 128], strides = [1, 1]} : vector<1x384xf32> to vector<1x128xf32>
    %27 = vector.extract_strided_slice %23 {offsets = [0, 128], sizes = [1, 128], strides = [1, 1]} : vector<1x384xf32> to vector<1x128xf32>
    %28 = vector.extract_strided_slice %23 {offsets = [0, 256], sizes = [1, 128], strides = [1, 1]} : vector<1x384xf32> to vector<1x128xf32>
    %29 = arith.mulf %27, %12 : vector<1x128xf32>
    %30 = arith.mulf %26, %25 : vector<1x128xf32>
    %31 = arith.addf %29, %30 : vector<1x128xf32>
    %32 = math.tanh %31 : vector<1x128xf32>
    %33 = arith.mulf %28, %32 : vector<1x128xf32>
    %c0_22 = arith.constant 0 : index
    %c0_23 = arith.constant 0 : index
    %34 = vector.load %arg11[%c0_22, %c0_23] : memref<1x128xf32, #tpu.memory_space<vmem>>, vector<1x128xf32>
    tpu.vector_store %arg11[%c0_22, %c0_23], %31 {strides = array<i32>} : memref<1x128xf32, #tpu.memory_space<vmem>>, vector<1x128xf32>,
    %c0_24 = arith.constant 0 : index
    %c0_25 = arith.constant 0 : index
    %35 = vector.load %arg10[%c0_24, %c0_25] : memref<1x128xf32, #tpu.memory_space<vmem>>, vector<1x128xf32>
    tpu.vector_store %arg10[%c0_24, %c0_25], %33 {strides = array<i32>} : memref<1x128xf32, #tpu.memory_space<vmem>>, vector<1x128xf32>,
    %36 = arith.index_cast %c0_i32 : i32 to index
    %c0_26 = arith.constant 0 : index
    %37 = vector.load %arg9[%36, %c0_26] : memref<8x128xf32, #tpu.memory_space<vmem>>, vector<1x128xf32>
    tpu.vector_store %arg9[%36, %c0_26], %33 {strides = array<i32>} : memref<8x128xf32, #tpu.memory_space<vmem>>, vector<1x128xf32>,
    %c1_i32 = arith.constant 1 : i32
    %c0_27 = arith.constant 0 : index
    %c0_28 = arith.constant 0 : index
    %38 = vector.load %arg10[%c0_27, %c0_28] : memref<1x128xf32, #tpu.memory_space<vmem>>, vector<1x128xf32>
    %c0_29 = arith.constant 0 : index
    %c0_30 = arith.constant 0 : index
    %39 = vector.load %arg11[%c0_29, %c0_30] : memref<1x128xf32, #tpu.memory_space<vmem>>, vector<1x128xf32>
    %40 = arith.index_cast %c1_i32 : i32 to index
    %c0_31 = arith.constant 0 : index
    %41 = vector.load %arg8[%40, %c0_31] : memref<8x512xf32, #tpu.memory_space<vmem>>, vector<1x512xf32>
    %c0_32 = arith.constant 0 : index
    %c0_33 = arith.constant 0 : index
    %42 = vector.load %arg3[%c0_32, %c0_33] : memref<128x512xf32, #tpu.memory_space<vmem>>, vector<128x512xf32>
    %cst_34 = arith.constant dense<0.000000e+00> : vector<1x512xf32>
    %43 = tpu.matmul %38, %42, %cst_34 {dimension_numbers = #tpu.dot_dimension_numbers<[1], [0], [0], [1], [0, 0, 1, 1], [], []>} : vector<1x128xf32>, vector<128x512xf32>, vector<1x512xf32> -> vector<1x512xf32>
    %44 = arith.addf %41, %43 : vector<1x512xf32>
    %45 = vector.extract_strided_slice %44 {offsets = [0, 0], sizes = [1, 384], strides = [1, 1]} : vector<1x512xf32> to vector<1x384xf32>
    %46 = arith.negf %45 : vector<1x384xf32>
    %47 = math.exp %46 : vector<1x384xf32>
    %cst_35 = arith.constant 1.000000e+00 : f32
    %48 = vector.broadcast %cst_35 : f32 to vector<1x384xf32>
    %49 = arith.addf %48, %47 : vector<1x384xf32>
    %50 = arith.divf %48, %49 : vector<1x384xf32>
    %51 = vector.extract_strided_slice %44 {offsets = [0, 384], sizes = [1, 128], strides = [1, 1]} : vector<1x512xf32> to vector<1x128xf32>
    %52 = math.tanh %51 : vector<1x128xf32>
    %53 = vector.extract_strided_slice %50 {offsets = [0, 0], sizes = [1, 128], strides = [1, 1]} : vector<1x384xf32> to vector<1x128xf32>
    %54 = vector.extract_strided_slice %50 {offsets = [0, 128], sizes = [1, 128], strides = [1, 1]} : vector<1x384xf32> to vector<1x128xf32>
    %55 = vector.extract_strided_slice %50 {offsets = [0, 256], sizes = [1, 128], strides = [1, 1]} : vector<1x384xf32> to vector<1x128xf32>
    %56 = arith.mulf %54, %39 : vector<1x128xf32>
    %57 = arith.mulf %53, %52 : vector<1x128xf32>
    %58 = arith.addf %56, %57 : vector<1x128xf32>
    %59 = math.tanh %58 : vector<1x128xf32>
    %60 = arith.mulf %55, %59 : vector<1x128xf32>
    %c0_36 = arith.constant 0 : index
    %c0_37 = arith.constant 0 : index
    %61 = vector.load %arg11[%c0_36, %c0_37] : memref<1x128xf32, #tpu.memory_space<vmem>>, vector<1x128xf32>
    tpu.vector_store %arg11[%c0_36, %c0_37], %58 {strides = array<i32>} : memref<1x128xf32, #tpu.memory_space<vmem>>, vector<1x128xf32>,
    %c0_38 = arith.constant 0 : index
    %c0_39 = arith.constant 0 : index
    %62 = vector.load %arg10[%c0_38, %c0_39] : memref<1x128xf32, #tpu.memory_space<vmem>>, vector<1x128xf32>
    tpu.vector_store %arg10[%c0_38, %c0_39], %60 {strides = array<i32>} : memref<1x128xf32, #tpu.memory_space<vmem>>, vector<1x128xf32>,
    %63 = arith.index_cast %c1_i32 : i32 to index
    %c0_40 = arith.constant 0 : index
    %64 = vector.load %arg9[%63, %c0_40] : memref<8x128xf32, #tpu.memory_space<vmem>>, vector<1x128xf32>
    tpu.vector_store %arg9[%63, %c0_40], %60 {strides = array<i32>} : memref<8x128xf32, #tpu.memory_space<vmem>>, vector<1x128xf32>,
    %c2_i32 = arith.constant 2 : i32
    %c0_41 = arith.constant 0 : index
    %c0_42 = arith.constant 0 : index
    %65 = vector.load %arg10[%c0_41, %c0_42] : memref<1x128xf32, #tpu.memory_space<vmem>>, vector<1x128xf32>
    %c0_43 = arith.constant 0 : index
    %c0_44 = arith.constant 0 : index
    %66 = vector.load %arg11[%c0_43, %c0_44] : memref<1x128xf32, #tpu.memory_space<vmem>>, vector<1x128xf32>
    %67 = arith.index_cast %c2_i32 : i32 to index
    %c0_45 = arith.constant 0 : index
    %68 = vector.load %arg8[%67, %c0_45] : memref<8x512xf32, #tpu.memory_space<vmem>>, vector<1x512xf32>
    %c0_46 = arith.constant 0 : index
    %c0_47 = arith.constant 0 : index
    %69 = vector.load %arg3[%c0_46, %c0_47] : memref<128x512xf32, #tpu.memory_space<vmem>>, vector<128x512xf32>
    %cst_48 = arith.constant dense<0.000000e+00> : vector<1x512xf32>
    %70 = tpu.matmul %65, %69, %cst_48 {dimension_numbers = #tpu.dot_dimension_numbers<[1], [0], [0], [1], [0, 0, 1, 1], [], []>} : vector<1x128xf32>, vector<128x512xf32>, vector<1x512xf32> -> vector<1x512xf32>
    %71 = arith.addf %68, %70 : vector<1x512xf32>
    %72 = vector.extract_strided_slice %71 {offsets = [0, 0], sizes = [1, 384], strides = [1, 1]} : vector<1x512xf32> to vector<1x384xf32>
    %73 = arith.negf %72 : vector<1x384xf32>
    %74 = math.exp %73 : vector<1x384xf32>
    %cst_49 = arith.constant 1.000000e+00 : f32
    %75 = vector.broadcast %cst_49 : f32 to vector<1x384xf32>
    %76 = arith.addf %75, %74 : vector<1x384xf32>
    %77 = arith.divf %75, %76 : vector<1x384xf32>
    %78 = vector.extract_strided_slice %71 {offsets = [0, 384], sizes = [1, 128], strides = [1, 1]} : vector<1x512xf32> to vector<1x128xf32>
    %79 = math.tanh %78 : vector<1x128xf32>
    %80 = vector.extract_strided_slice %77 {offsets = [0, 0], sizes = [1, 128], strides = [1, 1]} : vector<1x384xf32> to vector<1x128xf32>
    %81 = vector.extract_strided_slice %77 {offsets = [0, 128], sizes = [1, 128], strides = [1, 1]} : vector<1x384xf32> to vector<1x128xf32>
    %82 = vector.extract_strided_slice %77 {offsets = [0, 256], sizes = [1, 128], strides = [1, 1]} : vector<1x384xf32> to vector<1x128xf32>
    %83 = arith.mulf %81, %66 : vector<1x128xf32>
    %84 = arith.mulf %80, %79 : vector<1x128xf32>
    %85 = arith.addf %83, %84 : vector<1x128xf32>
    %86 = math.tanh %85 : vector<1x128xf32>
    %87 = arith.mulf %82, %86 : vector<1x128xf32>
    %c0_50 = arith.constant 0 : index
    %c0_51 = arith.constant 0 : index
    %88 = vector.load %arg11[%c0_50, %c0_51] : memref<1x128xf32, #tpu.memory_space<vmem>>, vector<1x128xf32>
    tpu.vector_store %arg11[%c0_50, %c0_51], %85 {strides = array<i32>} : memref<1x128xf32, #tpu.memory_space<vmem>>, vector<1x128xf32>,
    %c0_52 = arith.constant 0 : index
    %c0_53 = arith.constant 0 : index
    %89 = vector.load %arg10[%c0_52, %c0_53] : memref<1x128xf32, #tpu.memory_space<vmem>>, vector<1x128xf32>
    tpu.vector_store %arg10[%c0_52, %c0_53], %87 {strides = array<i32>} : memref<1x128xf32, #tpu.memory_space<vmem>>, vector<1x128xf32>,
    %90 = arith.index_cast %c2_i32 : i32 to index
    %c0_54 = arith.constant 0 : index
    %91 = vector.load %arg9[%90, %c0_54] : memref<8x128xf32, #tpu.memory_space<vmem>>, vector<1x128xf32>
    tpu.vector_store %arg9[%90, %c0_54], %87 {strides = array<i32>} : memref<8x128xf32, #tpu.memory_space<vmem>>, vector<1x128xf32>,
    %c3_i32 = arith.constant 3 : i32
    %c0_55 = arith.constant 0 : index
    %c0_56 = arith.constant 0 : index
    %92 = vector.load %arg10[%c0_55, %c0_56] : memref<1x128xf32, #tpu.memory_space<vmem>>, vector<1x128xf32>
    %c0_57 = arith.constant 0 : index
    %c0_58 = arith.constant 0 : index
    %93 = vector.load %arg11[%c0_57, %c0_58] : memref<1x128xf32, #tpu.memory_space<vmem>>, vector<1x128xf32>
    %94 = arith.index_cast %c3_i32 : i32 to index
    %c0_59 = arith.constant 0 : index
    %95 = vector.load %arg8[%94, %c0_59] : memref<8x512xf32, #tpu.memory_space<vmem>>, vector<1x512xf32>
    %c0_60 = arith.constant 0 : index
    %c0_61 = arith.constant 0 : index
    %96 = vector.load %arg3[%c0_60, %c0_61] : memref<128x512xf32, #tpu.memory_space<vmem>>, vector<128x512xf32>
    %cst_62 = arith.constant dense<0.000000e+00> : vector<1x512xf32>
    %97 = tpu.matmul %92, %96, %cst_62 {dimension_numbers = #tpu.dot_dimension_numbers<[1], [0], [0], [1], [0, 0, 1, 1], [], []>} : vector<1x128xf32>, vector<128x512xf32>, vector<1x512xf32> -> vector<1x512xf32>
    %98 = arith.addf %95, %97 : vector<1x512xf32>
    %99 = vector.extract_strided_slice %98 {offsets = [0, 0], sizes = [1, 384], strides = [1, 1]} : vector<1x512xf32> to vector<1x384xf32>
    %100 = arith.negf %99 : vector<1x384xf32>
    %101 = math.exp %100 : vector<1x384xf32>
    %cst_63 = arith.constant 1.000000e+00 : f32
    %102 = vector.broadcast %cst_63 : f32 to vector<1x384xf32>
    %103 = arith.addf %102, %101 : vector<1x384xf32>
    %104 = arith.divf %102, %103 : vector<1x384xf32>
    %105 = vector.extract_strided_slice %98 {offsets = [0, 384], sizes = [1, 128], strides = [1, 1]} : vector<1x512xf32> to vector<1x128xf32>
    %106 = math.tanh %105 : vector<1x128xf32>
    %107 = vector.extract_strided_slice %104 {offsets = [0, 0], sizes = [1, 128], strides = [1, 1]} : vector<1x384xf32> to vector<1x128xf32>
    %108 = vector.extract_strided_slice %104 {offsets = [0, 128], sizes = [1, 128], strides = [1, 1]} : vector<1x384xf32> to vector<1x128xf32>
    %109 = vector.extract_strided_slice %104 {offsets = [0, 256], sizes = [1, 128], strides = [1, 1]} : vector<1x384xf32> to vector<1x128xf32>
    %110 = arith.mulf %108, %93 : vector<1x128xf32>
    %111 = arith.mulf %107, %106 : vector<1x128xf32>
    %112 = arith.addf %110, %111 : vector<1x128xf32>
    %113 = math.tanh %112 : vector<1x128xf32>
    %114 = arith.mulf %109, %113 : vector<1x128xf32>
    %c0_64 = arith.constant 0 : index
    %c0_65 = arith.constant 0 : index
    %115 = vector.load %arg11[%c0_64, %c0_65] : memref<1x128xf32, #tpu.memory_space<vmem>>, vector<1x128xf32>
    tpu.vector_store %arg11[%c0_64, %c0_65], %112 {strides = array<i32>} : memref<1x128xf32, #tpu.memory_space<vmem>>, vector<1x128xf32>,
    %c0_66 = arith.constant 0 : index
    %c0_67 = arith.constant 0 : index
    %116 = vector.load %arg10[%c0_66, %c0_67] : memref<1x128xf32, #tpu.memory_space<vmem>>, vector<1x128xf32>
    tpu.vector_store %arg10[%c0_66, %c0_67], %114 {strides = array<i32>} : memref<1x128xf32, #tpu.memory_space<vmem>>, vector<1x128xf32>,
    %117 = arith.index_cast %c3_i32 : i32 to index
    %c0_68 = arith.constant 0 : index
    %118 = vector.load %arg9[%117, %c0_68] : memref<8x128xf32, #tpu.memory_space<vmem>>, vector<1x128xf32>
    tpu.vector_store %arg9[%117, %c0_68], %114 {strides = array<i32>} : memref<8x128xf32, #tpu.memory_space<vmem>>, vector<1x128xf32>,
    %c4_i32 = arith.constant 4 : i32
    %c0_69 = arith.constant 0 : index
    %c0_70 = arith.constant 0 : index
    %119 = vector.load %arg10[%c0_69, %c0_70] : memref<1x128xf32, #tpu.memory_space<vmem>>, vector<1x128xf32>
    %c0_71 = arith.constant 0 : index
    %c0_72 = arith.constant 0 : index
    %120 = vector.load %arg11[%c0_71, %c0_72] : memref<1x128xf32, #tpu.memory_space<vmem>>, vector<1x128xf32>
    %121 = arith.index_cast %c4_i32 : i32 to index
    %c0_73 = arith.constant 0 : index
    %122 = vector.load %arg8[%121, %c0_73] : memref<8x512xf32, #tpu.memory_space<vmem>>, vector<1x512xf32>
    %c0_74 = arith.constant 0 : index
    %c0_75 = arith.constant 0 : index
    %123 = vector.load %arg3[%c0_74, %c0_75] : memref<128x512xf32, #tpu.memory_space<vmem>>, vector<128x512xf32>
    %cst_76 = arith.constant dense<0.000000e+00> : vector<1x512xf32>
    %124 = tpu.matmul %119, %123, %cst_76 {dimension_numbers = #tpu.dot_dimension_numbers<[1], [0], [0], [1], [0, 0, 1, 1], [], []>} : vector<1x128xf32>, vector<128x512xf32>, vector<1x512xf32> -> vector<1x512xf32>
    %125 = arith.addf %122, %124 : vector<1x512xf32>
    %126 = vector.extract_strided_slice %125 {offsets = [0, 0], sizes = [1, 384], strides = [1, 1]} : vector<1x512xf32> to vector<1x384xf32>
    %127 = arith.negf %126 : vector<1x384xf32>
    %128 = math.exp %127 : vector<1x384xf32>
    %cst_77 = arith.constant 1.000000e+00 : f32
    %129 = vector.broadcast %cst_77 : f32 to vector<1x384xf32>
    %130 = arith.addf %129, %128 : vector<1x384xf32>
    %131 = arith.divf %129, %130 : vector<1x384xf32>
    %132 = vector.extract_strided_slice %125 {offsets = [0, 384], sizes = [1, 128], strides = [1, 1]} : vector<1x512xf32> to vector<1x128xf32>
    %133 = math.tanh %132 : vector<1x128xf32>
    %134 = vector.extract_strided_slice %131 {offsets = [0, 0], sizes = [1, 128], strides = [1, 1]} : vector<1x384xf32> to vector<1x128xf32>
    %135 = vector.extract_strided_slice %131 {offsets = [0, 128], sizes = [1, 128], strides = [1, 1]} : vector<1x384xf32> to vector<1x128xf32>
    %136 = vector.extract_strided_slice %131 {offsets = [0, 256], sizes = [1, 128], strides = [1, 1]} : vector<1x384xf32> to vector<1x128xf32>
    %137 = arith.mulf %135, %120 : vector<1x128xf32>
    %138 = arith.mulf %134, %133 : vector<1x128xf32>
    %139 = arith.addf %137, %138 : vector<1x128xf32>
    %140 = math.tanh %139 : vector<1x128xf32>
    %141 = arith.mulf %136, %140 : vector<1x128xf32>
    %c0_78 = arith.constant 0 : index
    %c0_79 = arith.constant 0 : index
    %142 = vector.load %arg11[%c0_78, %c0_79] : memref<1x128xf32, #tpu.memory_space<vmem>>, vector<1x128xf32>
    tpu.vector_store %arg11[%c0_78, %c0_79], %139 {strides = array<i32>} : memref<1x128xf32, #tpu.memory_space<vmem>>, vector<1x128xf32>,
    %c0_80 = arith.constant 0 : index
    %c0_81 = arith.constant 0 : index
    %143 = vector.load %arg10[%c0_80, %c0_81] : memref<1x128xf32, #tpu.memory_space<vmem>>, vector<1x128xf32>
    tpu.vector_store %arg10[%c0_80, %c0_81], %141 {strides = array<i32>} : memref<1x128xf32, #tpu.memory_space<vmem>>, vector<1x128xf32>,
    %144 = arith.index_cast %c4_i32 : i32 to index
    %c0_82 = arith.constant 0 : index
    %145 = vector.load %arg9[%144, %c0_82] : memref<8x128xf32, #tpu.memory_space<vmem>>, vector<1x128xf32>
    tpu.vector_store %arg9[%144, %c0_82], %141 {strides = array<i32>} : memref<8x128xf32, #tpu.memory_space<vmem>>, vector<1x128xf32>,
    %c5_i32 = arith.constant 5 : i32
    %c0_83 = arith.constant 0 : index
    %c0_84 = arith.constant 0 : index
    %146 = vector.load %arg10[%c0_83, %c0_84] : memref<1x128xf32, #tpu.memory_space<vmem>>, vector<1x128xf32>
    %c0_85 = arith.constant 0 : index
    %c0_86 = arith.constant 0 : index
    %147 = vector.load %arg11[%c0_85, %c0_86] : memref<1x128xf32, #tpu.memory_space<vmem>>, vector<1x128xf32>
    %148 = arith.index_cast %c5_i32 : i32 to index
    %c0_87 = arith.constant 0 : index
    %149 = vector.load %arg8[%148, %c0_87] : memref<8x512xf32, #tpu.memory_space<vmem>>, vector<1x512xf32>
    %c0_88 = arith.constant 0 : index
    %c0_89 = arith.constant 0 : index
    %150 = vector.load %arg3[%c0_88, %c0_89] : memref<128x512xf32, #tpu.memory_space<vmem>>, vector<128x512xf32>
    %cst_90 = arith.constant dense<0.000000e+00> : vector<1x512xf32>
    %151 = tpu.matmul %146, %150, %cst_90 {dimension_numbers = #tpu.dot_dimension_numbers<[1], [0], [0], [1], [0, 0, 1, 1], [], []>} : vector<1x128xf32>, vector<128x512xf32>, vector<1x512xf32> -> vector<1x512xf32>
    %152 = arith.addf %149, %151 : vector<1x512xf32>
    %153 = vector.extract_strided_slice %152 {offsets = [0, 0], sizes = [1, 384], strides = [1, 1]} : vector<1x512xf32> to vector<1x384xf32>
    %154 = arith.negf %153 : vector<1x384xf32>
    %155 = math.exp %154 : vector<1x384xf32>
    %cst_91 = arith.constant 1.000000e+00 : f32
    %156 = vector.broadcast %cst_91 : f32 to vector<1x384xf32>
    %157 = arith.addf %156, %155 : vector<1x384xf32>
    %158 = arith.divf %156, %157 : vector<1x384xf32>
    %159 = vector.extract_strided_slice %152 {offsets = [0, 384], sizes = [1, 128], strides = [1, 1]} : vector<1x512xf32> to vector<1x128xf32>
    %160 = math.tanh %159 : vector<1x128xf32>
    %161 = vector.extract_strided_slice %158 {offsets = [0, 0], sizes = [1, 128], strides = [1, 1]} : vector<1x384xf32> to vector<1x128xf32>
    %162 = vector.extract_strided_slice %158 {offsets = [0, 128], sizes = [1, 128], strides = [1, 1]} : vector<1x384xf32> to vector<1x128xf32>
    %163 = vector.extract_strided_slice %158 {offsets = [0, 256], sizes = [1, 128], strides = [1, 1]} : vector<1x384xf32> to vector<1x128xf32>
    %164 = arith.mulf %162, %147 : vector<1x128xf32>
    %165 = arith.mulf %161, %160 : vector<1x128xf32>
    %166 = arith.addf %164, %165 : vector<1x128xf32>
    %167 = math.tanh %166 : vector<1x128xf32>
    %168 = arith.mulf %163, %167 : vector<1x128xf32>
    %c0_92 = arith.constant 0 : index
    %c0_93 = arith.constant 0 : index
    %169 = vector.load %arg11[%c0_92, %c0_93] : memref<1x128xf32, #tpu.memory_space<vmem>>, vector<1x128xf32>
    tpu.vector_store %arg11[%c0_92, %c0_93], %166 {strides = array<i32>} : memref<1x128xf32, #tpu.memory_space<vmem>>, vector<1x128xf32>,
    %c0_94 = arith.constant 0 : index
    %c0_95 = arith.constant 0 : index
    %170 = vector.load %arg10[%c0_94, %c0_95] : memref<1x128xf32, #tpu.memory_space<vmem>>, vector<1x128xf32>
    tpu.vector_store %arg10[%c0_94, %c0_95], %168 {strides = array<i32>} : memref<1x128xf32, #tpu.memory_space<vmem>>, vector<1x128xf32>,
    %171 = arith.index_cast %c5_i32 : i32 to index
    %c0_96 = arith.constant 0 : index
    %172 = vector.load %arg9[%171, %c0_96] : memref<8x128xf32, #tpu.memory_space<vmem>>, vector<1x128xf32>
    tpu.vector_store %arg9[%171, %c0_96], %168 {strides = array<i32>} : memref<8x128xf32, #tpu.memory_space<vmem>>, vector<1x128xf32>,
    %c6_i32 = arith.constant 6 : i32
    %c0_97 = arith.constant 0 : index
    %c0_98 = arith.constant 0 : index
    %173 = vector.load %arg10[%c0_97, %c0_98] : memref<1x128xf32, #tpu.memory_space<vmem>>, vector<1x128xf32>
    %c0_99 = arith.constant 0 : index
    %c0_100 = arith.constant 0 : index
    %174 = vector.load %arg11[%c0_99, %c0_100] : memref<1x128xf32, #tpu.memory_space<vmem>>, vector<1x128xf32>
    %175 = arith.index_cast %c6_i32 : i32 to index
    %c0_101 = arith.constant 0 : index
    %176 = vector.load %arg8[%175, %c0_101] : memref<8x512xf32, #tpu.memory_space<vmem>>, vector<1x512xf32>
    %c0_102 = arith.constant 0 : index
    %c0_103 = arith.constant 0 : index
    %177 = vector.load %arg3[%c0_102, %c0_103] : memref<128x512xf32, #tpu.memory_space<vmem>>, vector<128x512xf32>
    %cst_104 = arith.constant dense<0.000000e+00> : vector<1x512xf32>
    %178 = tpu.matmul %173, %177, %cst_104 {dimension_numbers = #tpu.dot_dimension_numbers<[1], [0], [0], [1], [0, 0, 1, 1], [], []>} : vector<1x128xf32>, vector<128x512xf32>, vector<1x512xf32> -> vector<1x512xf32>
    %179 = arith.addf %176, %178 : vector<1x512xf32>
    %180 = vector.extract_strided_slice %179 {offsets = [0, 0], sizes = [1, 384], strides = [1, 1]} : vector<1x512xf32> to vector<1x384xf32>
    %181 = arith.negf %180 : vector<1x384xf32>
    %182 = math.exp %181 : vector<1x384xf32>
    %cst_105 = arith.constant 1.000000e+00 : f32
    %183 = vector.broadcast %cst_105 : f32 to vector<1x384xf32>
    %184 = arith.addf %183, %182 : vector<1x384xf32>
    %185 = arith.divf %183, %184 : vector<1x384xf32>
    %186 = vector.extract_strided_slice %179 {offsets = [0, 384], sizes = [1, 128], strides = [1, 1]} : vector<1x512xf32> to vector<1x128xf32>
    %187 = math.tanh %186 : vector<1x128xf32>
    %188 = vector.extract_strided_slice %185 {offsets = [0, 0], sizes = [1, 128], strides = [1, 1]} : vector<1x384xf32> to vector<1x128xf32>
    %189 = vector.extract_strided_slice %185 {offsets = [0, 128], sizes = [1, 128], strides = [1, 1]} : vector<1x384xf32> to vector<1x128xf32>
    %190 = vector.extract_strided_slice %185 {offsets = [0, 256], sizes = [1, 128], strides = [1, 1]} : vector<1x384xf32> to vector<1x128xf32>
    %191 = arith.mulf %189, %174 : vector<1x128xf32>
    %192 = arith.mulf %188, %187 : vector<1x128xf32>
    %193 = arith.addf %191, %192 : vector<1x128xf32>
    %194 = math.tanh %193 : vector<1x128xf32>
    %195 = arith.mulf %190, %194 : vector<1x128xf32>
    %c0_106 = arith.constant 0 : index
    %c0_107 = arith.constant 0 : index
    %196 = vector.load %arg11[%c0_106, %c0_107] : memref<1x128xf32, #tpu.memory_space<vmem>>, vector<1x128xf32>
    tpu.vector_store %arg11[%c0_106, %c0_107], %193 {strides = array<i32>} : memref<1x128xf32, #tpu.memory_space<vmem>>, vector<1x128xf32>,
    %c0_108 = arith.constant 0 : index
    %c0_109 = arith.constant 0 : index
    %197 = vector.load %arg10[%c0_108, %c0_109] : memref<1x128xf32, #tpu.memory_space<vmem>>, vector<1x128xf32>
    tpu.vector_store %arg10[%c0_108, %c0_109], %195 {strides = array<i32>} : memref<1x128xf32, #tpu.memory_space<vmem>>, vector<1x128xf32>,
    %198 = arith.index_cast %c6_i32 : i32 to index
    %c0_110 = arith.constant 0 : index
    %199 = vector.load %arg9[%198, %c0_110] : memref<8x128xf32, #tpu.memory_space<vmem>>, vector<1x128xf32>
    tpu.vector_store %arg9[%198, %c0_110], %195 {strides = array<i32>} : memref<8x128xf32, #tpu.memory_space<vmem>>, vector<1x128xf32>,
    %c7_i32 = arith.constant 7 : i32
    %c0_111 = arith.constant 0 : index
    %c0_112 = arith.constant 0 : index
    %200 = vector.load %arg10[%c0_111, %c0_112] : memref<1x128xf32, #tpu.memory_space<vmem>>, vector<1x128xf32>
    %c0_113 = arith.constant 0 : index
    %c0_114 = arith.constant 0 : index
    %201 = vector.load %arg11[%c0_113, %c0_114] : memref<1x128xf32, #tpu.memory_space<vmem>>, vector<1x128xf32>
    %202 = arith.index_cast %c7_i32 : i32 to index
    %c0_115 = arith.constant 0 : index
    %203 = vector.load %arg8[%202, %c0_115] : memref<8x512xf32, #tpu.memory_space<vmem>>, vector<1x512xf32>
    %c0_116 = arith.constant 0 : index
    %c0_117 = arith.constant 0 : index
    %204 = vector.load %arg3[%c0_116, %c0_117] : memref<128x512xf32, #tpu.memory_space<vmem>>, vector<128x512xf32>
    %cst_118 = arith.constant dense<0.000000e+00> : vector<1x512xf32>
    %205 = tpu.matmul %200, %204, %cst_118 {dimension_numbers = #tpu.dot_dimension_numbers<[1], [0], [0], [1], [0, 0, 1, 1], [], []>} : vector<1x128xf32>, vector<128x512xf32>, vector<1x512xf32> -> vector<1x512xf32>
    %206 = arith.addf %203, %205 : vector<1x512xf32>
    %207 = vector.extract_strided_slice %206 {offsets = [0, 0], sizes = [1, 384], strides = [1, 1]} : vector<1x512xf32> to vector<1x384xf32>
    %208 = arith.negf %207 : vector<1x384xf32>
    %209 = math.exp %208 : vector<1x384xf32>
    %cst_119 = arith.constant 1.000000e+00 : f32
    %210 = vector.broadcast %cst_119 : f32 to vector<1x384xf32>
    %211 = arith.addf %210, %209 : vector<1x384xf32>
    %212 = arith.divf %210, %211 : vector<1x384xf32>
    %213 = vector.extract_strided_slice %206 {offsets = [0, 384], sizes = [1, 128], strides = [1, 1]} : vector<1x512xf32> to vector<1x128xf32>
    %214 = math.tanh %213 : vector<1x128xf32>
    %215 = vector.extract_strided_slice %212 {offsets = [0, 0], sizes = [1, 128], strides = [1, 1]} : vector<1x384xf32> to vector<1x128xf32>
    %216 = vector.extract_strided_slice %212 {offsets = [0, 128], sizes = [1, 128], strides = [1, 1]} : vector<1x384xf32> to vector<1x128xf32>
    %217 = vector.extract_strided_slice %212 {offsets = [0, 256], sizes = [1, 128], strides = [1, 1]} : vector<1x384xf32> to vector<1x128xf32>
    %218 = arith.mulf %216, %201 : vector<1x128xf32>
    %219 = arith.mulf %215, %214 : vector<1x128xf32>
    %220 = arith.addf %218, %219 : vector<1x128xf32>
    %221 = math.tanh %220 : vector<1x128xf32>
    %222 = arith.mulf %217, %221 : vector<1x128xf32>
    %c0_120 = arith.constant 0 : index
    %c0_121 = arith.constant 0 : index
    %223 = vector.load %arg11[%c0_120, %c0_121] : memref<1x128xf32, #tpu.memory_space<vmem>>, vector<1x128xf32>
    tpu.vector_store %arg11[%c0_120, %c0_121], %220 {strides = array<i32>} : memref<1x128xf32, #tpu.memory_space<vmem>>, vector<1x128xf32>,
    %c0_122 = arith.constant 0 : index
    %c0_123 = arith.constant 0 : index
    %224 = vector.load %arg10[%c0_122, %c0_123] : memref<1x128xf32, #tpu.memory_space<vmem>>, vector<1x128xf32>
    tpu.vector_store %arg10[%c0_122, %c0_123], %222 {strides = array<i32>} : memref<1x128xf32, #tpu.memory_space<vmem>>, vector<1x128xf32>,
    %225 = arith.index_cast %c7_i32 : i32 to index
    %c0_124 = arith.constant 0 : index
    %226 = vector.load %arg9[%225, %c0_124] : memref<8x128xf32, #tpu.memory_space<vmem>>, vector<1x128xf32>
    tpu.vector_store %arg9[%225, %c0_124], %222 {strides = array<i32>} : memref<8x128xf32, #tpu.memory_space<vmem>>, vector<1x128xf32>,
    %c8_i32 = arith.constant 8 : i32
    %c0_125 = arith.constant 0 : index
    %c0_126 = arith.constant 0 : index
    %227 = vector.load %arg9[%c0_125, %c0_126] : memref<8x128xf32, #tpu.memory_space<vmem>>, vector<8x128xf32>
    %c0_127 = arith.constant 0 : index
    %c0_128 = arith.constant 0 : index
    %228 = vector.load %arg5[%c0_127, %c0_128] : memref<128x128xf32, #tpu.memory_space<vmem>>, vector<128x128xf32>
    %cst_129 = arith.constant dense<0.000000e+00> : vector<8x128xf32>
    %229 = tpu.matmul %227, %228, %cst_129 {dimension_numbers = #tpu.dot_dimension_numbers<[1], [0], [0], [1], [0, 0, 1, 1], [], []>} : vector<8x128xf32>, vector<128x128xf32>, vector<8x128xf32> -> vector<8x128xf32>
    %c0_130 = arith.constant 0 : index
    %c0_131 = arith.constant 0 : index
    %230 = vector.load %arg6[%c0_130, %c0_131] : memref<1x128xf32, #tpu.memory_space<vmem>>, vector<1x128xf32>
    %231 = vector.broadcast %230 : vector<1x128xf32> to vector<8x128xf32>
    %232 = arith.addf %229, %231 : vector<8x128xf32>
    %c0_132 = arith.constant 0 : index
    %c0_133 = arith.constant 0 : index
    %233 = vector.load %arg7[%c0_132, %c0_133] : memref<8x128xf32, #tpu.memory_space<vmem>>, vector<8x128xf32>
    tpu.vector_store %arg7[%c0_132, %c0_133], %232 {strides = array<i32>} : memref<8x128xf32, #tpu.memory_space<vmem>>, vector<8x128xf32>,
    return
  }
  func.func @transform_0(%arg0: i32) -> (i32, i32) {
    %c0_i32 = arith.constant 0 : i32
    %c0_i32_0 = arith.constant 0 : i32
    %c0_i32_1 = arith.constant 0 : i32
    return %c0_i32, %c0_i32_0 : i32, i32
  }
  func.func @transform_1(%arg0: i32) -> (i32, i32) {
    %c0_i32 = arith.constant 0 : i32
    %c0_i32_0 = arith.constant 0 : i32
    %c0_i32_1 = arith.constant 0 : i32
    return %c0_i32, %c0_i32_0 : i32, i32
  }
  func.func @transform_2(%arg0: i32) -> (i32, i32) {
    %c0_i32 = arith.constant 0 : i32
    %c0_i32_0 = arith.constant 0 : i32
    %c0_i32_1 = arith.constant 0 : i32
    return %c0_i32, %c0_i32_0 : i32, i32
  }
  func.func @transform_3(%arg0: i32) -> (i32, i32) {
    %c0_i32 = arith.constant 0 : i32
    %c0_i32_0 = arith.constant 0 : i32
    %c0_i32_1 = arith.constant 0 : i32
    return %c0_i32, %c0_i32_0 : i32, i32
  }
  func.func @transform_4(%arg0: i32) -> (i32, i32) {
    %c0_i32 = arith.constant 0 : i32
    %c0_i32_0 = arith.constant 0 : i32
    %c0_i32_1 = arith.constant 0 : i32
    return %c0_i32, %c0_i32_0 : i32, i32
  }
  func.func @transform_5(%arg0: i32) -> (i32, i32) {
    %c0_i32 = arith.constant 0 : i32
    %c0_i32_0 = arith.constant 0 : i32
    %c0_i32_1 = arith.constant 0 : i32
    return %c0_i32, %c0_i32_0 : i32, i32
  }
  func.func @transform_6(%arg0: i32) -> (i32, i32) {
    %c0_i32 = arith.constant 0 : i32
    %c0_i32_0 = arith.constant 0 : i32
    %c0_i32_1 = arith.constant 0 : i32
    return %c0_i32, %c0_i32_0 : i32, i32
  }
}

</mosaic_0001>

<llo_original>
// kernel: tpu_custom_call.1
$region0: #{tpu_custom_call.1}
  #allocation0 [shape = 'u32[]', space=smem, size = 0x4, offset = 0x4, fixed_abs, tag = 'smem constant byte address 0x4 - core index']
  #allocation1 [shape = 'u32[72,128]{1,0:T(1,128)}', space=vmem, size = 0x9000, scoped, tag = 'internal scratch']
  #allocation2 [shape = 'f32[8,512]{1,0:T(8,128)}', space=vmem, size = 0x4000, scoped, tag = 'scratch operand']
  #allocation3 [shape = 'f32[8,128]{1,0:T(8,128)}', space=vmem, size = 0x1000, scoped, tag = 'scratch operand']
  #allocation4 [shape = 'f32[1,128]{1,0:T(1,128)}', space=vmem, size = 0x200, scoped, tag = 'scratch operand']
  #allocation5 [shape = 'f32[1,128]{1,0:T(1,128)}', space=vmem, size = 0x200, scoped, tag = 'scratch operand']
  %s0 = inlined_call_operand.hbm [shape: f32[8,128], index: 0, kind: input, shape index: {}]
  %s1 = inlined_call_operand.hbm [shape: f32[128,512], index: 1, kind: input, shape index: {}]
  %s2 = inlined_call_operand.hbm [shape: f32[128,512], index: 2, kind: input, shape index: {}]
  %s3 = inlined_call_operand.hbm [shape: f32[1,512], index: 3, kind: input, shape index: {}]
  %s4 = inlined_call_operand.hbm [shape: f32[128,128], index: 4, kind: input, shape index: {}]
  %s5 = inlined_call_operand.vmem [shape: f32[1,128], index: 5, kind: input, shape index: {}]
  %s6 = inlined_call_operand.hbm [shape: f32[8,128], index: 6, kind: output, shape index: {}]
  %s7 = sld [smem:[#allocation0]]
  $region54: #{tpu_custom_call.1} parent=0
    _
  %s9 = ssub.s32 1, %s7
  %s10 = scalar_select 0, %s9, %s7
  $region1: #{tpu_custom_call.1} parent=0
    #allocation6 [shape = 'u8[4096]{0}', space=vmem, size = 0x1000, scoped, tag = 'input window, operand 0, single buffered']
    #allocation7 [shape = 's32[1]{0}', space=sflag, size = 0x4, scoped, tag = 'scoped memory for tpu_custom_call.1']
    #allocation8 [shape = 's32[1]{0}', space=sflag, size = 0x4, scoped, tag = 'scoped memory for tpu_custom_call.1']
    #allocation9 [shape = 'u8[262144]{0}', space=vmem, size = 0x40000, scoped, tag = 'input window, operand 1, single buffered']
    #allocation10 [shape = 's32[1]{0}', space=sflag, size = 0x4, scoped, tag = 'scoped memory for tpu_custom_call.1']
    #allocation11 [shape = 'u8[262144]{0}', space=vmem, size = 0x40000, scoped, tag = 'input window, operand 2, single buffered']
    #allocation12 [shape = 'u8[2048]{0}', space=vmem, size = 0x800, scoped, tag = 'input window, operand 3, single buffered']
    #allocation13 [shape = 's32[1]{0}', space=sflag, size = 0x4, scoped, tag = 'scoped memory for tpu_custom_call.1']
    #allocation14 [shape = 'u8[65536]{0}', space=vmem, size = 0x10000, scoped, tag = 'input window, operand 4, single buffered']
    #allocation15 [shape = 'u8[4096]{0}', space=vmem, size = 0x1000, scoped, tag = 'output window, operand 0, single buffered']
    %11 = vsyncpa [#allocation7], 0
    %12 = vsyncpa [#allocation10], 0
    %13 = vsyncpa [#allocation13], 0
    %14 = vsyncpa [#allocation8], 0
    // Predicated region
    $region2: #{tpu_custom_call.1} parent=1 // pred_check
      _
    $region3: #{tpu_custom_call.1} parent=1 // pred_check_branch
      %16 = sbr.rel (0) target = $region5
    $region4: #{tpu_custom_call.1} parent=1 // pred_region
      %18 = vsyncadd [#allocation7], 0
      %s20 = sshll.u32 %s0, 4
      %s21 = int_to_ptr.hbm [resolvable:$true] %s20
      %s22 = sshll.u32 [#allocation6], 4
      %s23 = int_to_ptr.vmem [resolvable:$true] %s22
      %25 = dma.hbm_to_vmem [thread:$0]  %s21, 128, %s23, [#allocation7]
    $region5: #{tpu_custom_call.1} parent=1 // pred_fallthru
      _
    // Predicated region
    $region6: #{tpu_custom_call.1} parent=1 // pred_check
      _
    $region7: #{tpu_custom_call.1} parent=1 // pred_check_branch
      %27 = sbr.rel (0) target = $region9
    $region8: #{tpu_custom_call.1} parent=1 // pred_region
      %29 = vsyncadd [#allocation10], 0
      %s30 = sshll.u32 %s1, 4
      %s31 = int_to_ptr.hbm [resolvable:$true] %s30
      %s32 = sshll.u32 [#allocation9], 4
      %s33 = int_to_ptr.vmem [resolvable:$true] %s32
      %38 = dma.hbm_to_vmem [thread:$0]  %s31, 8192, %s33, [#allocation10], 512, 512, 32
    $region9: #{tpu_custom_call.1} parent=1 // pred_fallthru
      _
    // Predicated region
    $region10: #{tpu_custom_call.1} parent=1 // pred_check
      _
    $region11: #{tpu_custom_call.1} parent=1 // pred_check_branch
      %40 = sbr.rel (0) target = $region13
    $region12: #{tpu_custom_call.1} parent=1 // pred_region
      %42 = vsyncadd [#allocation10], 0
      %s43 = sshll.u32 %s2, 4
      %s44 = int_to_ptr.hbm [resolvable:$true] %s43
      %s45 = sshll.u32 [#allocation11], 4
      %s46 = int_to_ptr.vmem [resolvable:$true] %s45
      %51 = dma.hbm_to_vmem [thread:$0]  %s44, 8192, %s46, [#allocation10], 512, 512, 32
    $region13: #{tpu_custom_call.1} parent=1 // pred_fallthru
      _
    // Predicated region
    $region14: #{tpu_custom_call.1} parent=1 // pred_check
      _
    $region15: #{tpu_custom_call.1} parent=1 // pred_check_branch
      %53 = sbr.rel (0) target = $region17
    $region16: #{tpu_custom_call.1} parent=1 // pred_region
      %55 = vsyncadd [#allocation13], 0
      %s57 = sshll.u32 %s3, 4
      %s58 = int_to_ptr.hbm [resolvable:$true] %s57
      %s59 = sshll.u32 [#allocation12], 4
      %s60 = int_to_ptr.vmem [resolvable:$true] %s59
      %62 = dma.hbm_to_vmem [thread:$0]  %s58, 64, %s60, [#allocation13]
    $region17: #{tpu_custom_call.1} parent=1 // pred_fallthru
      _
    // Predicated region
    $region18: #{tpu_custom_call.1} parent=1 // pred_check
      _
    $region19: #{tpu_custom_call.1} parent=1 // pred_check_branch
      %64 = sbr.rel (0) target = $region21
    $region20: #{tpu_custom_call.1} parent=1 // pred_region
      %66 = vsyncadd [#allocation13], 0
      %s67 = sshll.u32 %s4, 4
      %s68 = int_to_ptr.hbm [resolvable:$true] %s67
      %s69 = sshll.u32 [#allocation14], 4
      %s70 = int_to_ptr.vmem [resolvable:$true] %s69
      %75 = dma.hbm_to_vmem [thread:$0]  %s68, 2048, %s70, [#allocation13], 128, 128, 8
    $region21: #{tpu_custom_call.1} parent=1 // pred_fallthru
      _
    // Predicated region
    $region22: #{tpu_custom_call.1} parent=1 // pred_check
      _
    $region23: #{tpu_custom_call.1} parent=1 // pred_check_branch
      %77 = sbr.rel (0) target = $region25
    $region24: #{tpu_custom_call.1} parent=1 // pred_region
      _
    $region25: #{tpu_custom_call.1} parent=1 // pred_fallthru
      _
    // Predicated region
    $region26: #{tpu_custom_call.1} parent=1 // pred_check
      _
    $region27: #{tpu_custom_call.1} parent=1 // pred_check_branch
      %79 = sbr.rel (0) target = $region29
    $region28: #{tpu_custom_call.1} parent=1 // pred_region
      %81 = dma.done [#allocation7], 128
    $region29: #{tpu_custom_call.1} parent=1 // pred_fallthru
      _
    // Predicated region
    $region30: #{tpu_custom_call.1} parent=1 // pred_check
      _
    $region31: #{tpu_custom_call.1} parent=1 // pred_check_branch
      %83 = sbr.rel (0) target = $region33
    $region32: #{tpu_custom_call.1} parent=1 // pred_region
      %85 = dma.done [#allocation10], 8192
    $region33: #{tpu_custom_call.1} parent=1 // pred_fallthru
      _
    // Predicated region
    $region34: #{tpu_custom_call.1} parent=1 // pred_check
      _
    $region35: #{tpu_custom_call.1} parent=1 // pred_check_branch
      %87 = sbr.rel (0) target = $region37
    $region36: #{tpu_custom_call.1} parent=1 // pred_region
      %89 = dma.done [#allocation10], 8192
    $region37: #{tpu_custom_call.1} parent=1 // pred_fallthru
      _
    // Predicated region
    $region38: #{tpu_custom_call.1} parent=1 // pred_check
      _
    $region39: #{tpu_custom_call.1} parent=1 // pred_check_branch
      %91 = sbr.rel (0) target = $region41
    $region40: #{tpu_custom_call.1} parent=1 // pred_region
      %93 = dma.done [#allocation13], 64
    $region41: #{tpu_custom_call.1} parent=1 // pred_fallthru
      _
    // Predicated region
    $region42: #{tpu_custom_call.1} parent=1 // pred_check
      _
    $region43: #{tpu_custom_call.1} parent=1 // pred_check_branch
      %95 = sbr.rel (0) target = $region45
    $region44: #{tpu_custom_call.1} parent=1 // pred_region
      %97 = dma.done [#allocation13], 2048
    $region45: #{tpu_custom_call.1} parent=1 // pred_fallthru
      _
    %v98 = vld [vmem:[#allocation6] sm:$0xff]
    %v99 = vld [vmem:[#allocation9] sm:$0xff]
    %v100 = vld [vmem:[#allocation9 + $0x8] sm:$0xff]
    %v101 = vld [vmem:[#allocation9 + $0x10] sm:$0xff]
    %v102 = vld [vmem:[#allocation9 + $0x18] sm:$0xff]
    %v103 = vld [vmem:[#allocation9 + $0x20] sm:$0xff]
    %v104 = vld [vmem:[#allocation9 + $0x28] sm:$0xff]
    %v105 = vld [vmem:[#allocation9 + $0x30] sm:$0xff]
    %v106 = vld [vmem:[#allocation9 + $0x38] sm:$0xff]
    %v107 = vld [vmem:[#allocation9 + $0x40] sm:$0xff]
    %v108 = vld [vmem:[#allocation9 + $0x48] sm:$0xff]
    %v109 = vld [vmem:[#allocation9 + $0x50] sm:$0xff]
    %v110 = vld [vmem:[#allocation9 + $0x58] sm:$0xff]
    %v111 = vld [vmem:[#allocation9 + $0x60] sm:$0xff]
    %v112 = vld [vmem:[#allocation9 + $0x68] sm:$0xff]
    %v113 = vld [vmem:[#allocation9 + $0x70] sm:$0xff]
    %v114 = vld [vmem:[#allocation9 + $0x78] sm:$0xff]
    %v115 = vld [vmem:[#allocation9 + $0x80] sm:$0xff]
    %v116 = vld [vmem:[#allocation9 + $0x88] sm:$0xff]
    %v117 = vld [vmem:[#allocation9 + $0x90] sm:$0xff]
    %v118 = vld [vmem:[#allocation9 + $0x98] sm:$0xff]
    %v119 = vld [vmem:[#allocation9 + $0xa0] sm:$0xff]
    %v120 = vld [vmem:[#allocation9 + $0xa8] sm:$0xff]
    %v121 = vld [vmem:[#allocation9 + $0xb0] sm:$0xff]
    %v122 = vld [vmem:[#allocation9 + $0xb8] sm:$0xff]
    %v123 = vld [vmem:[#allocation9 + $0xc0] sm:$0xff]
    %v124 = vld [vmem:[#allocation9 + $0xc8] sm:$0xff]
    %v125 = vld [vmem:[#allocation9 + $0xd0] sm:$0xff]
    %v126 = vld [vmem:[#allocation9 + $0xd8] sm:$0xff]
    %v127 = vld [vmem:[#allocation9 + $0xe0] sm:$0xff]
    %v128 = vld [vmem:[#allocation9 + $0xe8] sm:$0xff]
    %v129 = vld [vmem:[#allocation9 + $0xf0] sm:$0xff]
    %v130 = vld [vmem:[#allocation9 + $0xf8] sm:$0xff]
    %v131 = vld [vmem:[#allocation9 + $0x100] sm:$0xff]
    %v132 = vld [vmem:[#allocation9 + $0x108] sm:$0xff]
    %v133 = vld [vmem:[#allocation9 + $0x110] sm:$0xff]
    %v134 = vld [vmem:[#allocation9 + $0x118] sm:$0xff]
    %v135 = vld [vmem:[#allocation9 + $0x120] sm:$0xff]
    %v136 = vld [vmem:[#allocation9 + $0x128] sm:$0xff]
    %v137 = vld [vmem:[#allocation9 + $0x130] sm:$0xff]
    %v138 = vld [vmem:[#allocation9 + $0x138] sm:$0xff]
    %v139 = vld [vmem:[#allocation9 + $0x140] sm:$0xff]
    %v140 = vld [vmem:[#allocation9 + $0x148] sm:$0xff]
    %v141 = vld [vmem:[#allocation9 + $0x150] sm:$0xff]
    %v142 = vld [vmem:[#allocation9 + $0x158] sm:$0xff]
    %v143 = vld [vmem:[#allocation9 + $0x160] sm:$0xff]
    %v144 = vld [vmem:[#allocation9 + $0x168] sm:$0xff]
    %v145 = vld [vmem:[#allocation9 + $0x170] sm:$0xff]
    %v146 = vld [vmem:[#allocation9 + $0x178] sm:$0xff]
    %v147 = vld [vmem:[#allocation9 + $0x180] sm:$0xff]
    %v148 = vld [vmem:[#allocation9 + $0x188] sm:$0xff]
    %v149 = vld [vmem:[#allocation9 + $0x190] sm:$0xff]
    %v150 = vld [vmem:[#allocation9 + $0x198] sm:$0xff]
    %v151 = vld [vmem:[#allocation9 + $0x1a0] sm:$0xff]
    %v152 = vld [vmem:[#allocation9 + $0x1a8] sm:$0xff]
    %v153 = vld [vmem:[#allocation9 + $0x1b0] sm:$0xff]
    %v154 = vld [vmem:[#allocation9 + $0x1b8] sm:$0xff]
    %v155 = vld [vmem:[#allocation9 + $0x1c0] sm:$0xff]
    %v156 = vld [vmem:[#allocation9 + $0x1c8] sm:$0xff]
    %v157 = vld [vmem:[#allocation9 + $0x1d0] sm:$0xff]
    %v158 = vld [vmem:[#allocation9 + $0x1d8] sm:$0xff]
    %v159 = vld [vmem:[#allocation9 + $0x1e0] sm:$0xff]
    %v160 = vld [vmem:[#allocation9 + $0x1e8] sm:$0xff]
    %v161 = vld [vmem:[#allocation9 + $0x1f0] sm:$0xff]
    %v162 = vld [vmem:[#allocation9 + $0x1f8] sm:$0xff]
    %v163 = vld [vmem:[#allocation12] sm:$0xf]
    %v165 = vperm.slane %v163, 0
    %v166 = vperm.slane %v163, 1
    %v167 = vperm.slane %v163, 2
    %v168 = vperm.slane %v163, 3
    %173 = vmatpush.msra.mxu0 %v159
    %174 = vmatpush.msra.mxu0 %v155
    %175 = vmatpush.msra.mxu0 %v151
    %176 = vmatpush.msra.mxu0 %v147
    %177 = vmatpush.msra.mxu0 %v143
    %178 = vmatpush.msra.mxu0 %v139
    %179 = vmatpush.msra.mxu0 %v135
    %180 = vmatpush.msra.mxu0 %v131
    %181 = vmatpush.msra.mxu0 %v127
    %182 = vmatpush.msra.mxu0 %v123
    %183 = vmatpush.msra.mxu0 %v119
    %184 = vmatpush.msra.mxu0 %v115
    %185 = vmatpush.msra.mxu0 %v111
    %186 = vmatpush.msra.mxu0 %v107
    %187 = vmatpush.msra.mxu0 %v103
    %188 = vmatpush.msra.mxu0 %v99
    %189 = vmatmul.f32.gmra.mxu0 %v98
    %v190 = vpop.f32.mrf.mxu0
    %v191 = vadd.f32 %v165, %v190
    %192 = vdwg.mxu0
    %193 = vmatpush.msra.mxu0 %v160
    %194 = vmatpush.msra.mxu0 %v156
    %195 = vmatpush.msra.mxu0 %v152
    %196 = vmatpush.msra.mxu0 %v148
    %197 = vmatpush.msra.mxu0 %v144
    %198 = vmatpush.msra.mxu0 %v140
    %199 = vmatpush.msra.mxu0 %v136
    %200 = vmatpush.msra.mxu0 %v132
    %201 = vmatpush.msra.mxu0 %v128
    %202 = vmatpush.msra.mxu0 %v124
    %203 = vmatpush.msra.mxu0 %v120
    %204 = vmatpush.msra.mxu0 %v116
    %205 = vmatpush.msra.mxu0 %v112
    %206 = vmatpush.msra.mxu0 %v108
    %207 = vmatpush.msra.mxu0 %v104
    %208 = vmatpush.msra.mxu0 %v100
    %209 = vmatmul.f32.gmra.mxu0 %v98
    %v210 = vpop.f32.mrf.mxu0
    %v211 = vadd.f32 %v166, %v210
    %212 = vdwg.mxu0
    %213 = vmatpush.msra.mxu0 %v161
    %214 = vmatpush.msra.mxu0 %v157
    %215 = vmatpush.msra.mxu0 %v153
    %216 = vmatpush.msra.mxu0 %v149
    %217 = vmatpush.msra.mxu0 %v145
    %218 = vmatpush.msra.mxu0 %v141
    %219 = vmatpush.msra.mxu0 %v137
    %220 = vmatpush.msra.mxu0 %v133
    %221 = vmatpush.msra.mxu0 %v129
    %222 = vmatpush.msra.mxu0 %v125
    %223 = vmatpush.msra.mxu0 %v121
    %224 = vmatpush.msra.mxu0 %v117
    %225 = vmatpush.msra.mxu0 %v113
    %226 = vmatpush.msra.mxu0 %v109
    %227 = vmatpush.msra.mxu0 %v105
    %228 = vmatpush.msra.mxu0 %v101
    %229 = vmatmul.f32.gmra.mxu0 %v98
    %v230 = vpop.f32.mrf.mxu0
    %v231 = vadd.f32 %v167, %v230
    %232 = vdwg.mxu0
    %233 = vmatpush.msra.mxu0 %v162
    %234 = vmatpush.msra.mxu0 %v158
    %235 = vmatpush.msra.mxu0 %v154
    %236 = vmatpush.msra.mxu0 %v150
    %237 = vmatpush.msra.mxu0 %v146
    %238 = vmatpush.msra.mxu0 %v142
    %239 = vmatpush.msra.mxu0 %v138
    %240 = vmatpush.msra.mxu0 %v134
    %241 = vmatpush.msra.mxu0 %v130
    %242 = vmatpush.msra.mxu0 %v126
    %243 = vmatpush.msra.mxu0 %v122
    %244 = vmatpush.msra.mxu0 %v118
    %245 = vmatpush.msra.mxu0 %v114
    %246 = vmatpush.msra.mxu0 %v110
    %247 = vmatpush.msra.mxu0 %v106
    %248 = vmatpush.msra.mxu0 %v102
    %249 = vmatmul.f32.gmra.mxu0 %v98
    %v250 = vpop.f32.mrf.mxu0
    %v251 = vadd.f32 %v168, %v250
    %252 = vdwg.mxu0
    %253 = vst [vmem:[#allocation2] sm:$0xff] %v191
    %254 = vst [vmem:[#allocation2 + $0x8] sm:$0xff] %v211
    %255 = vst [vmem:[#allocation2 + $0x10] sm:$0xff] %v231
    %256 = vst [vmem:[#allocation2 + $0x18] sm:$0xff] %v251
    %257 = vst [vmem:[#allocation4] sm:$0x1] 0.0
    %258 = vst [vmem:[#allocation5] sm:$0x1] 0.0
    %v259 = vld [vmem:[#allocation4] sm:$0x1]
    %v260 = vld [vmem:[#allocation5] sm:$0x1]
    %v261 = vld [vmem:[#allocation2] ss:$8 sm:$0xf]
    %v262 = vld [vmem:[#allocation11] sm:$0xff]
    %v263 = vld [vmem:[#allocation11 + $0x8] sm:$0xff]
    %v264 = vld [vmem:[#allocation11 + $0x10] sm:$0xff]
    %v265 = vld [vmem:[#allocation11 + $0x18] sm:$0xff]
    %v266 = vld [vmem:[#allocation11 + $0x20] sm:$0xff]
    %v267 = vld [vmem:[#allocation11 + $0x28] sm:$0xff]
    %v268 = vld [vmem:[#allocation11 + $0x30] sm:$0xff]
    %v269 = vld [vmem:[#allocation11 + $0x38] sm:$0xff]
    %v270 = vld [vmem:[#allocation11 + $0x40] sm:$0xff]
    %v271 = vld [vmem:[#allocation11 + $0x48] sm:$0xff]
    %v272 = vld [vmem:[#allocation11 + $0x50] sm:$0xff]
    %v273 = vld [vmem:[#allocation11 + $0x58] sm:$0xff]
    %v274 = vld [vmem:[#allocation11 + $0x60] sm:$0xff]
    %v275 = vld [vmem:[#allocation11 + $0x68] sm:$0xff]
    %v276 = vld [vmem:[#allocation11 + $0x70] sm:$0xff]
    %v277 = vld [vmem:[#allocation11 + $0x78] sm:$0xff]
    %v278 = vld [vmem:[#allocation11 + $0x80] sm:$0xff]
    %v279 = vld [vmem:[#allocation11 + $0x88] sm:$0xff]
    %v280 = vld [vmem:[#allocation11 + $0x90] sm:$0xff]
    %v281 = vld [vmem:[#allocation11 + $0x98] sm:$0xff]
    %v282 = vld [vmem:[#allocation11 + $0xa0] sm:$0xff]
    %v283 = vld [vmem:[#allocation11 + $0xa8] sm:$0xff]
    %v284 = vld [vmem:[#allocation11 + $0xb0] sm:$0xff]
    %v285 = vld [vmem:[#allocation11 + $0xb8] sm:$0xff]
    %v286 = vld [vmem:[#allocation11 + $0xc0] sm:$0xff]
    %v287 = vld [vmem:[#allocation11 + $0xc8] sm:$0xff]
    %v288 = vld [vmem:[#allocation11 + $0xd0] sm:$0xff]
    %v289 = vld [vmem:[#allocation11 + $0xd8] sm:$0xff]
    %v290 = vld [vmem:[#allocation11 + $0xe0] sm:$0xff]
    %v291 = vld [vmem:[#allocation11 + $0xe8] sm:$0xff]
    %v292 = vld [vmem:[#allocation11 + $0xf0] sm:$0xff]
    %v293 = vld [vmem:[#allocation11 + $0xf8] sm:$0xff]
    %v294 = vld [vmem:[#allocation11 + $0x100] sm:$0xff]
    %v295 = vld [vmem:[#allocation11 + $0x108] sm:$0xff]
    %v296 = vld [vmem:[#allocation11 + $0x110] sm:$0xff]
    %v297 = vld [vmem:[#allocation11 + $0x118] sm:$0xff]
    %v298 = vld [vmem:[#allocation11 + $0x120] sm:$0xff]
    %v299 = vld [vmem:[#allocation11 + $0x128] sm:$0xff]
    %v300 = vld [vmem:[#allocation11 + $0x130] sm:$0xff]
    %v301 = vld [vmem:[#allocation11 + $0x138] sm:$0xff]
    %v302 = vld [vmem:[#allocation11 + $0x140] sm:$0xff]
    %v303 = vld [vmem:[#allocation11 + $0x148] sm:$0xff]
    %v304 = vld [vmem:[#allocation11 + $0x150] sm:$0xff]
    %v305 = vld [vmem:[#allocation11 + $0x158] sm:$0xff]
    %v306 = vld [vmem:[#allocation11 + $0x160] sm:$0xff]
    %v307 = vld [vmem:[#allocation11 + $0x168] sm:$0xff]
    %v308 = vld [vmem:[#allocation11 + $0x170] sm:$0xff]
    %v309 = vld [vmem:[#allocation11 + $0x178] sm:$0xff]
    %v310 = vld [vmem:[#allocation11 + $0x180] sm:$0xff]
    %v311 = vld [vmem:[#allocation11 + $0x188] sm:$0xff]
    %v312 = vld [vmem:[#allocation11 + $0x190] sm:$0xff]
    %v313 = vld [vmem:[#allocation11 + $0x198] sm:$0xff]
    %v314 = vld [vmem:[#allocation11 + $0x1a0] sm:$0xff]
    %v315 = vld [vmem:[#allocation11 + $0x1a8] sm:$0xff]
    %v316 = vld [vmem:[#allocation11 + $0x1b0] sm:$0xff]
    %v317 = vld [vmem:[#allocation11 + $0x1b8] sm:$0xff]
    %v318 = vld [vmem:[#allocation11 + $0x1c0] sm:$0xff]
    %v319 = vld [vmem:[#allocation11 + $0x1c8] sm:$0xff]
    %v320 = vld [vmem:[#allocation11 + $0x1d0] sm:$0xff]
    %v321 = vld [vmem:[#allocation11 + $0x1d8] sm:$0xff]
    %v322 = vld [vmem:[#allocation11 + $0x1e0] sm:$0xff]
    %v323 = vld [vmem:[#allocation11 + $0x1e8] sm:$0xff]
    %v324 = vld [vmem:[#allocation11 + $0x1f0] sm:$0xff]
    %v325 = vld [vmem:[#allocation11 + $0x1f8] sm:$0xff]
    %326 = vmatpush.msra.mxu0 %v322
    %327 = vmatpush.msra.mxu0 %v318
    %328 = vmatpush.msra.mxu0 %v314
    %329 = vmatpush.msra.mxu0 %v310
    %330 = vmatpush.msra.mxu0 %v306
    %331 = vmatpush.msra.mxu0 %v302
    %332 = vmatpush.msra.mxu0 %v298
    %333 = vmatpush.msra.mxu0 %v294
    %334 = vmatpush.msra.mxu0 %v290
    %335 = vmatpush.msra.mxu0 %v286
    %336 = vmatpush.msra.mxu0 %v282
    %337 = vmatpush.msra.mxu0 %v278
    %338 = vmatpush.msra.mxu0 %v274
    %339 = vmatpush.msra.mxu0 %v270
    %340 = vmatpush.msra.mxu0 %v266
    %341 = vmatpush.msra.mxu0 %v262
    %342 = vmatmul.f32.gmra.mxu0 %v259
    %v343 = vpop.f32.mrf.mxu0
    %v344 = vadd.f32 0.0, %v343
    %345 = vdwg.mxu0
    %346 = vmatpush.msra.mxu0 %v323
    %347 = vmatpush.msra.mxu0 %v319
    %348 = vmatpush.msra.mxu0 %v315
    %349 = vmatpush.msra.mxu0 %v311
    %350 = vmatpush.msra.mxu0 %v307
    %351 = vmatpush.msra.mxu0 %v303
    %352 = vmatpush.msra.mxu0 %v299
    %353 = vmatpush.msra.mxu0 %v295
    %354 = vmatpush.msra.mxu0 %v291
    %355 = vmatpush.msra.mxu0 %v287
    %356 = vmatpush.msra.mxu0 %v283
    %357 = vmatpush.msra.mxu0 %v279
    %358 = vmatpush.msra.mxu0 %v275
    %359 = vmatpush.msra.mxu0 %v271
    %360 = vmatpush.msra.mxu0 %v267
    %361 = vmatpush.msra.mxu0 %v263
    %362 = vmatmul.f32.gmra.mxu0 %v259
    %v363 = vpop.f32.mrf.mxu0
    %v364 = vadd.f32 0.0, %v363
    %365 = vdwg.mxu0
    %366 = vmatpush.msra.mxu0 %v324
    %367 = vmatpush.msra.mxu0 %v320
    %368 = vmatpush.msra.mxu0 %v316
    %369 = vmatpush.msra.mxu0 %v312
    %370 = vmatpush.msra.mxu0 %v308
    %371 = vmatpush.msra.mxu0 %v304
    %372 = vmatpush.msra.mxu0 %v300
    %373 = vmatpush.msra.mxu0 %v296
    %374 = vmatpush.msra.mxu0 %v292
    %375 = vmatpush.msra.mxu0 %v288
    %376 = vmatpush.msra.mxu0 %v284
    %377 = vmatpush.msra.mxu0 %v280
    %378 = vmatpush.msra.mxu0 %v276
    %379 = vmatpush.msra.mxu0 %v272
    %380 = vmatpush.msra.mxu0 %v268
    %381 = vmatpush.msra.mxu0 %v264
    %382 = vmatmul.f32.gmra.mxu0 %v259
    %v383 = vpop.f32.mrf.mxu0
    %v384 = vadd.f32 0.0, %v383
    %385 = vdwg.mxu0
    %386 = vmatpush.msra.mxu0 %v325
    %387 = vmatpush.msra.mxu0 %v321
    %388 = vmatpush.msra.mxu0 %v317
    %389 = vmatpush.msra.mxu0 %v313
    %390 = vmatpush.msra.mxu0 %v309
    %391 = vmatpush.msra.mxu0 %v305
    %392 = vmatpush.msra.mxu0 %v301
    %393 = vmatpush.msra.mxu0 %v297
    %394 = vmatpush.msra.mxu0 %v293
    %395 = vmatpush.msra.mxu0 %v289
    %396 = vmatpush.msra.mxu0 %v285
    %397 = vmatpush.msra.mxu0 %v281
    %398 = vmatpush.msra.mxu0 %v277
    %399 = vmatpush.msra.mxu0 %v273
    %400 = vmatpush.msra.mxu0 %v269
    %401 = vmatpush.msra.mxu0 %v265
    %402 = vmatmul.f32.gmra.mxu0 %v259
    %v403 = vpop.f32.mrf.mxu0
    %v404 = vadd.f32 0.0, %v403
    %405 = vdwg.mxu0
    %v410 = vrot.slane %v364, 7
    %v411 = vrot.slane %v384, 6
    %v412 = vrot.slane %v404, 5
    %vm413 = vcmask 1040384
    %v414 = vsel %vm413, %v344, %v410
    %vm415 = vcmask 1042434
    %v416 = vsel %vm415, %v411, %v412
    %vm417 = vcmask 1041408
    %v418 = vsel %vm417, %v414, %v416
    %v420 = vadd.f32 %v261, %v418
    %v421 = vxor.u32 %v420, 2147483648
    %v422 = vmul.f32 %v421, 1.442695
    %v423 = vpow.pop %v422
    %v424 = vadd.f32 %v423, 1.0
    %v425 = vrcp.pop %v424
    %v426 = vmul.f32 %v424, %v425
    %v427 = vsub.f32 1.0, %v426
    %v428 = vmul.f32 %v425, %v427
    %v429 = vadd.f32 %v425, %v428
    %vm430 = vweird.f32 %v424
    %vm431 = vweird.f32 %v425
    %vm432 = vmor %vm430, %vm431
    %v433 = vsel %vm432, %v425, %v429
    %v434 = vand.u32 2147483647, %v424
    %vm435 = vcmp.eq.f32.partialorder %v434, 8.507059e+37
    %v436 = vand.u32 %v424, 2147483648
    %v437 = vor.u32 1.1754944e-38, %v436
    %v438 = vsel %vm435, %v437, %v433
    %v439 = vmul.f32 1.0, %v438
    %v441 = vrot.slane %v420, 3
    %v443 = vtanh.pop %v441
    %v445 = vrot.slane %v439, 1
    %v447 = vmul.f32 %v445, %v260
    %v448 = vmul.f32 %v439, %v443
    %v449 = vadd.f32 %v447, %v448
    %v450 = vtanh.pop %v449
    %v451 = vrot.slane %v439, 2
    %v453 = vmul.f32 %v451, %v450
    %454 = vst [vmem:[#allocation5] sm:$0x1] %v449
    %455 = vst [vmem:[#allocation4] sm:$0x1] %v453
    %456 = vst [vmem:[#allocation3] sm:$0x1] %v453
    %v457 = vld [vmem:[#allocation4] sm:$0x1]
    %v458 = vld [vmem:[#allocation5] sm:$0x1]
    %s459 = scalar_lea.vmem [#allocation2], 1
    %v460 = vld [vmem:[%s459] ss:$8 sm:$0xf]
    %v461 = vld [vmem:[#allocation11] sm:$0xff]
    %v462 = vld [vmem:[#allocation11 + $0x8] sm:$0xff]
    %v463 = vld [vmem:[#allocation11 + $0x10] sm:$0xff]
    %v464 = vld [vmem:[#allocation11 + $0x18] sm:$0xff]
    %v465 = vld [vmem:[#allocation11 + $0x20] sm:$0xff]
    %v466 = vld [vmem:[#allocation11 + $0x28] sm:$0xff]
    %v467 = vld [vmem:[#allocation11 + $0x30] sm:$0xff]
    %v468 = vld [vmem:[#allocation11 + $0x38] sm:$0xff]
    %v469 = vld [vmem:[#allocation11 + $0x40] sm:$0xff]
    %v470 = vld [vmem:[#allocation11 + $0x48] sm:$0xff]
    %v471 = vld [vmem:[#allocation11 + $0x50] sm:$0xff]
    %v472 = vld [vmem:[#allocation11 + $0x58] sm:$0xff]
    %v473 = vld [vmem:[#allocation11 + $0x60] sm:$0xff]
    %v474 = vld [vmem:[#allocation11 + $0x68] sm:$0xff]
    %v475 = vld [vmem:[#allocation11 + $0x70] sm:$0xff]
    %v476 = vld [vmem:[#allocation11 + $0x78] sm:$0xff]
    %v477 = vld [vmem:[#allocation11 + $0x80] sm:$0xff]
    %v478 = vld [vmem:[#allocation11 + $0x88] sm:$0xff]
    %v479 = vld [vmem:[#allocation11 + $0x90] sm:$0xff]
    %v480 = vld [vmem:[#allocation11 + $0x98] sm:$0xff]
    %v481 = vld [vmem:[#allocation11 + $0xa0] sm:$0xff]
    %v482 = vld [vmem:[#allocation11 + $0xa8] sm:$0xff]
    %v483 = vld [vmem:[#allocation11 + $0xb0] sm:$0xff]
    %v484 = vld [vmem:[#allocation11 + $0xb8] sm:$0xff]
    %v485 = vld [vmem:[#allocation11 + $0xc0] sm:$0xff]
    %v486 = vld [vmem:[#allocation11 + $0xc8] sm:$0xff]
    %v487 = vld [vmem:[#allocation11 + $0xd0] sm:$0xff]
    %v488 = vld [vmem:[#allocation11 + $0xd8] sm:$0xff]
    %v489 = vld [vmem:[#allocation11 + $0xe0] sm:$0xff]
    %v490 = vld [vmem:[#allocation11 + $0xe8] sm:$0xff]
    %v491 = vld [vmem:[#allocation11 + $0xf0] sm:$0xff]
    %v492 = vld [vmem:[#allocation11 + $0xf8] sm:$0xff]
    %v493 = vld [vmem:[#allocation11 + $0x100] sm:$0xff]
    %v494 = vld [vmem:[#allocation11 + $0x108] sm:$0xff]
    %v495 = vld [vmem:[#allocation11 + $0x110] sm:$0xff]
    %v496 = vld [vmem:[#allocation11 + $0x118] sm:$0xff]
    %v497 = vld [vmem:[#allocation11 + $0x120] sm:$0xff]
    %v498 = vld [vmem:[#allocation11 + $0x128] sm:$0xff]
    %v499 = vld [vmem:[#allocation11 + $0x130] sm:$0xff]
    %v500 = vld [vmem:[#allocation11 + $0x138] sm:$0xff]
    %v501 = vld [vmem:[#allocation11 + $0x140] sm:$0xff]
    %v502 = vld [vmem:[#allocation11 + $0x148] sm:$0xff]
    %v503 = vld [vmem:[#allocation11 + $0x150] sm:$0xff]
    %v504 = vld [vmem:[#allocation11 + $0x158] sm:$0xff]
    %v505 = vld [vmem:[#allocation11 + $0x160] sm:$0xff]
    %v506 = vld [vmem:[#allocation11 + $0x168] sm:$0xff]
    %v507 = vld [vmem:[#allocation11 + $0x170] sm:$0xff]
    %v508 = vld [vmem:[#allocation11 + $0x178] sm:$0xff]
    %v509 = vld [vmem:[#allocation11 + $0x180] sm:$0xff]
    %v510 = vld [vmem:[#allocation11 + $0x188] sm:$0xff]
    %v511 = vld [vmem:[#allocation11 + $0x190] sm:$0xff]
    %v512 = vld [vmem:[#allocation11 + $0x198] sm:$0xff]
    %v513 = vld [vmem:[#allocation11 + $0x1a0] sm:$0xff]
    %v514 = vld [vmem:[#allocation11 + $0x1a8] sm:$0xff]
    %v515 = vld [vmem:[#allocation11 + $0x1b0] sm:$0xff]
    %v516 = vld [vmem:[#allocation11 + $0x1b8] sm:$0xff]
    %v517 = vld [vmem:[#allocation11 + $0x1c0] sm:$0xff]
    %v518 = vld [vmem:[#allocation11 + $0x1c8] sm:$0xff]
    %v519 = vld [vmem:[#allocation11 + $0x1d0] sm:$0xff]
    %v520 = vld [vmem:[#allocation11 + $0x1d8] sm:$0xff]
    %v521 = vld [vmem:[#allocation11 + $0x1e0] sm:$0xff]
    %v522 = vld [vmem:[#allocation11 + $0x1e8] sm:$0xff]
    %v523 = vld [vmem:[#allocation11 + $0x1f0] sm:$0xff]
    %v524 = vld [vmem:[#allocation11 + $0x1f8] sm:$0xff]
    %525 = vmatpush.msra.mxu0 %v521
    %526 = vmatpush.msra.mxu0 %v517
    %527 = vmatpush.msra.mxu0 %v513
    %528 = vmatpush.msra.mxu0 %v509
    %529 = vmatpush.msra.mxu0 %v505
    %530 = vmatpush.msra.mxu0 %v501
    %531 = vmatpush.msra.mxu0 %v497
    %532 = vmatpush.msra.mxu0 %v493
    %533 = vmatpush.msra.mxu0 %v489
    %534 = vmatpush.msra.mxu0 %v485
    %535 = vmatpush.msra.mxu0 %v481
    %536 = vmatpush.msra.mxu0 %v477
    %537 = vmatpush.msra.mxu0 %v473
    %538 = vmatpush.msra.mxu0 %v469
    %539 = vmatpush.msra.mxu0 %v465
    %540 = vmatpush.msra.mxu0 %v461
    %541 = vmatmul.f32.gmra.mxu0 %v457
    %v542 = vpop.f32.mrf.mxu0
    %v543 = vadd.f32 0.0, %v542
    %544 = vdwg.mxu0
    %545 = vmatpush.msra.mxu0 %v522
    %546 = vmatpush.msra.mxu0 %v518
    %547 = vmatpush.msra.mxu0 %v514
    %548 = vmatpush.msra.mxu0 %v510
    %549 = vmatpush.msra.mxu0 %v506
    %550 = vmatpush.msra.mxu0 %v502
    %551 = vmatpush.msra.mxu0 %v498
    %552 = vmatpush.msra.mxu0 %v494
    %553 = vmatpush.msra.mxu0 %v490
    %554 = vmatpush.msra.mxu0 %v486
    %555 = vmatpush.msra.mxu0 %v482
    %556 = vmatpush.msra.mxu0 %v478
    %557 = vmatpush.msra.mxu0 %v474
    %558 = vmatpush.msra.mxu0 %v470
    %559 = vmatpush.msra.mxu0 %v466
    %560 = vmatpush.msra.mxu0 %v462
    %561 = vmatmul.f32.gmra.mxu0 %v457
    %v562 = vpop.f32.mrf.mxu0
    %v563 = vadd.f32 0.0, %v562
    %564 = vdwg.mxu0
    %565 = vmatpush.msra.mxu0 %v523
    %566 = vmatpush.msra.mxu0 %v519
    %567 = vmatpush.msra.mxu0 %v515
    %568 = vmatpush.msra.mxu0 %v511
    %569 = vmatpush.msra.mxu0 %v507
    %570 = vmatpush.msra.mxu0 %v503
    %571 = vmatpush.msra.mxu0 %v499
    %572 = vmatpush.msra.mxu0 %v495
    %573 = vmatpush.msra.mxu0 %v491
    %574 = vmatpush.msra.mxu0 %v487
    %575 = vmatpush.msra.mxu0 %v483
    %576 = vmatpush.msra.mxu0 %v479
    %577 = vmatpush.msra.mxu0 %v475
    %578 = vmatpush.msra.mxu0 %v471
    %579 = vmatpush.msra.mxu0 %v467
    %580 = vmatpush.msra.mxu0 %v463
    %581 = vmatmul.f32.gmra.mxu0 %v457
    %v582 = vpop.f32.mrf.mxu0
    %v583 = vadd.f32 0.0, %v582
    %584 = vdwg.mxu0
    %585 = vmatpush.msra.mxu0 %v524
    %586 = vmatpush.msra.mxu0 %v520
    %587 = vmatpush.msra.mxu0 %v516
    %588 = vmatpush.msra.mxu0 %v512
    %589 = vmatpush.msra.mxu0 %v508
    %590 = vmatpush.msra.mxu0 %v504
    %591 = vmatpush.msra.mxu0 %v500
    %592 = vmatpush.msra.mxu0 %v496
    %593 = vmatpush.msra.mxu0 %v492
    %594 = vmatpush.msra.mxu0 %v488
    %595 = vmatpush.msra.mxu0 %v484
    %596 = vmatpush.msra.mxu0 %v480
    %597 = vmatpush.msra.mxu0 %v476
    %598 = vmatpush.msra.mxu0 %v472
    %599 = vmatpush.msra.mxu0 %v468
    %600 = vmatpush.msra.mxu0 %v464
    %601 = vmatmul.f32.gmra.mxu0 %v457
    %v602 = vpop.f32.mrf.mxu0
    %v603 = vadd.f32 0.0, %v602
    %604 = vdwg.mxu0
    %v609 = vrot.slane %v563, 7
    %v610 = vrot.slane %v583, 6
    %v611 = vrot.slane %v603, 5
    %v612 = vsel %vm413, %v543, %v609
    %v613 = vsel %vm415, %v610, %v611
    %v614 = vsel %vm417, %v612, %v613
    %v616 = vadd.f32 %v460, %v614
    %v617 = vxor.u32 %v616, 2147483648
    %v618 = vmul.f32 %v617, 1.442695
    %v619 = vpow.pop %v618
    %v620 = vadd.f32 %v619, 1.0
    %v621 = vrcp.pop %v620
    %v622 = vmul.f32 %v620, %v621
    %v623 = vsub.f32 1.0, %v622
    %v624 = vmul.f32 %v621, %v623
    %v625 = vadd.f32 %v621, %v624
    %vm626 = vweird.f32 %v620
    %vm627 = vweird.f32 %v621
    %vm628 = vmor %vm626, %vm627
    %v629 = vsel %vm628, %v621, %v625
    %v630 = vand.u32 2147483647, %v620
    %vm631 = vcmp.eq.f32.partialorder %v630, 8.507059e+37
    %v632 = vand.u32 %v620, 2147483648
    %v633 = vor.u32 1.1754944e-38, %v632
    %v634 = vsel %vm631, %v633, %v629
    %v635 = vmul.f32 1.0, %v634
    %v637 = vrot.slane %v616, 3
    %v639 = vtanh.pop %v637
    %v641 = vrot.slane %v635, 1
    %v643 = vmul.f32 %v641, %v458
    %v644 = vmul.f32 %v635, %v639
    %v645 = vadd.f32 %v643, %v644
    %v646 = vtanh.pop %v645
    %v647 = vrot.slane %v635, 2
    %v649 = vmul.f32 %v647, %v646
    %650 = vst [vmem:[#allocation5] sm:$0x1] %v645
    %651 = vst [vmem:[#allocation4] sm:$0x1] %v649
    %652 = vst [vmem:[#allocation3 + $0x1] sm:$0x1] %v649
    %v653 = vld [vmem:[#allocation4] sm:$0x1]
    %v654 = vld [vmem:[#allocation5] sm:$0x1]
    %s655 = scalar_lea.vmem [#allocation2], 2
    %v656 = vld [vmem:[%s655] ss:$8 sm:$0xf]
    %v657 = vld [vmem:[#allocation11] sm:$0xff]
    %v658 = vld [vmem:[#allocation11 + $0x8] sm:$0xff]
    %v659 = vld [vmem:[#allocation11 + $0x10] sm:$0xff]
    %v660 = vld [vmem:[#allocation11 + $0x18] sm:$0xff]
    %v661 = vld [vmem:[#allocation11 + $0x20] sm:$0xff]
    %v662 = vld [vmem:[#allocation11 + $0x28] sm:$0xff]
    %v663 = vld [vmem:[#allocation11 + $0x30] sm:$0xff]
    %v664 = vld [vmem:[#allocation11 + $0x38] sm:$0xff]
    %v665 = vld [vmem:[#allocation11 + $0x40] sm:$0xff]
    %v666 = vld [vmem:[#allocation11 + $0x48] sm:$0xff]
    %v667 = vld [vmem:[#allocation11 + $0x50] sm:$0xff]
    %v668 = vld [vmem:[#allocation11 + $0x58] sm:$0xff]
    %v669 = vld [vmem:[#allocation11 + $0x60] sm:$0xff]
    %v670 = vld [vmem:[#allocation11 + $0x68] sm:$0xff]
    %v671 = vld [vmem:[#allocation11 + $0x70] sm:$0xff]
    %v672 = vld [vmem:[#allocation11 + $0x78] sm:$0xff]
    %v673 = vld [vmem:[#allocation11 + $0x80] sm:$0xff]
    %v674 = vld [vmem:[#allocation11 + $0x88] sm:$0xff]
    %v675 = vld [vmem:[#allocation11 + $0x90] sm:$0xff]
    %v676 = vld [vmem:[#allocation11 + $0x98] sm:$0xff]
    %v677 = vld [vmem:[#allocation11 + $0xa0] sm:$0xff]
    %v678 = vld [vmem:[#allocation11 + $0xa8] sm:$0xff]
    %v679 = vld [vmem:[#allocation11 + $0xb0] sm:$0xff]
    %v680 = vld [vmem:[#allocation11 + $0xb8] sm:$0xff]
    %v681 = vld [vmem:[#allocation11 + $0xc0] sm:$0xff]
    %v682 = vld [vmem:[#allocation11 + $0xc8] sm:$0xff]
    %v683 = vld [vmem:[#allocation11 + $0xd0] sm:$0xff]
    %v684 = vld [vmem:[#allocation11 + $0xd8] sm:$0xff]
    %v685 = vld [vmem:[#allocation11 + $0xe0] sm:$0xff]
    %v686 = vld [vmem:[#allocation11 + $0xe8] sm:$0xff]
    %v687 = vld [vmem:[#allocation11 + $0xf0] sm:$0xff]
    %v688 = vld [vmem:[#allocation11 + $0xf8] sm:$0xff]
    %v689 = vld [vmem:[#allocation11 + $0x100] sm:$0xff]
    %v690 = vld [vmem:[#allocation11 + $0x108] sm:$0xff]
    %v691 = vld [vmem:[#allocation11 + $0x110] sm:$0xff]
    %v692 = vld [vmem:[#allocation11 + $0x118] sm:$0xff]
    %v693 = vld [vmem:[#allocation11 + $0x120] sm:$0xff]
    %v694 = vld [vmem:[#allocation11 + $0x128] sm:$0xff]
    %v695 = vld [vmem:[#allocation11 + $0x130] sm:$0xff]
    %v696 = vld [vmem:[#allocation11 + $0x138] sm:$0xff]
    %v697 = vld [vmem:[#allocation11 + $0x140] sm:$0xff]
    %v698 = vld [vmem:[#allocation11 + $0x148] sm:$0xff]
    %v699 = vld [vmem:[#allocation11 + $0x150] sm:$0xff]
    %v700 = vld [vmem:[#allocation11 + $0x158] sm:$0xff]
    %v701 = vld [vmem:[#allocation11 + $0x160] sm:$0xff]
    %v702 = vld [vmem:[#allocation11 + $0x168] sm:$0xff]
    %v703 = vld [vmem:[#allocation11 + $0x170] sm:$0xff]
    %v704 = vld [vmem:[#allocation11 + $0x178] sm:$0xff]
    %v705 = vld [vmem:[#allocation11 + $0x180] sm:$0xff]
    %v706 = vld [vmem:[#allocation11 + $0x188] sm:$0xff]
    %v707 = vld [vmem:[#allocation11 + $0x190] sm:$0xff]
    %v708 = vld [vmem:[#allocation11 + $0x198] sm:$0xff]
    %v709 = vld [vmem:[#allocation11 + $0x1a0] sm:$0xff]
    %v710 = vld [vmem:[#allocation11 + $0x1a8] sm:$0xff]
    %v711 = vld [vmem:[#allocation11 + $0x1b0] sm:$0xff]
    %v712 = vld [vmem:[#allocation11 + $0x1b8] sm:$0xff]
    %v713 = vld [vmem:[#allocation11 + $0x1c0] sm:$0xff]
    %v714 = vld [vmem:[#allocation11 + $0x1c8] sm:$0xff]
    %v715 = vld [vmem:[#allocation11 + $0x1d0] sm:$0xff]
    %v716 = vld [vmem:[#allocation11 + $0x1d8] sm:$0xff]
    %v717 = vld [vmem:[#allocation11 + $0x1e0] sm:$0xff]
    %v718 = vld [vmem:[#allocation11 + $0x1e8] sm:$0xff]
    %v719 = vld [vmem:[#allocation11 + $0x1f0] sm:$0xff]
    %v720 = vld [vmem:[#allocation11 + $0x1f8] sm:$0xff]
    %721 = vmatpush.msra.mxu0 %v717
    %722 = vmatpush.msra.mxu0 %v713
    %723 = vmatpush.msra.mxu0 %v709
    %724 = vmatpush.msra.mxu0 %v705
    %725 = vmatpush.msra.mxu0 %v701
    %726 = vmatpush.msra.mxu0 %v697
    %727 = vmatpush.msra.mxu0 %v693
    %728 = vmatpush.msra.mxu0 %v689
    %729 = vmatpush.msra.mxu0 %v685
    %730 = vmatpush.msra.mxu0 %v681
    %731 = vmatpush.msra.mxu0 %v677
    %732 = vmatpush.msra.mxu0 %v673
    %733 = vmatpush.msra.mxu0 %v669
    %734 = vmatpush.msra.mxu0 %v665
    %735 = vmatpush.msra.mxu0 %v661
    %736 = vmatpush.msra.mxu0 %v657
    %737 = vmatmul.f32.gmra.mxu0 %v653
    %v738 = vpop.f32.mrf.mxu0
    %v739 = vadd.f32 0.0, %v738
    %740 = vdwg.mxu0
    %741 = vmatpush.msra.mxu0 %v718
    %742 = vmatpush.msra.mxu0 %v714
    %743 = vmatpush.msra.mxu0 %v710
    %744 = vmatpush.msra.mxu0 %v706
    %745 = vmatpush.msra.mxu0 %v702
    %746 = vmatpush.msra.mxu0 %v698
    %747 = vmatpush.msra.mxu0 %v694
    %748 = vmatpush.msra.mxu0 %v690
    %749 = vmatpush.msra.mxu0 %v686
    %750 = vmatpush.msra.mxu0 %v682
    %751 = vmatpush.msra.mxu0 %v678
    %752 = vmatpush.msra.mxu0 %v674
    %753 = vmatpush.msra.mxu0 %v670
    %754 = vmatpush.msra.mxu0 %v666
    %755 = vmatpush.msra.mxu0 %v662
    %756 = vmatpush.msra.mxu0 %v658
    %757 = vmatmul.f32.gmra.mxu0 %v653
    %v758 = vpop.f32.mrf.mxu0
    %v759 = vadd.f32 0.0, %v758
    %760 = vdwg.mxu0
    %761 = vmatpush.msra.mxu0 %v719
    %762 = vmatpush.msra.mxu0 %v715
    %763 = vmatpush.msra.mxu0 %v711
    %764 = vmatpush.msra.mxu0 %v707
    %765 = vmatpush.msra.mxu0 %v703
    %766 = vmatpush.msra.mxu0 %v699
    %767 = vmatpush.msra.mxu0 %v695
    %768 = vmatpush.msra.mxu0 %v691
    %769 = vmatpush.msra.mxu0 %v687
    %770 = vmatpush.msra.mxu0 %v683
    %771 = vmatpush.msra.mxu0 %v679
    %772 = vmatpush.msra.mxu0 %v675
    %773 = vmatpush.msra.mxu0 %v671
    %774 = vmatpush.msra.mxu0 %v667
    %775 = vmatpush.msra.mxu0 %v663
    %776 = vmatpush.msra.mxu0 %v659
    %777 = vmatmul.f32.gmra.mxu0 %v653
    %v778 = vpop.f32.mrf.mxu0
    %v779 = vadd.f32 0.0, %v778
    %780 = vdwg.mxu0
    %781 = vmatpush.msra.mxu0 %v720
    %782 = vmatpush.msra.mxu0 %v716
    %783 = vmatpush.msra.mxu0 %v712
    %784 = vmatpush.msra.mxu0 %v708
    %785 = vmatpush.msra.mxu0 %v704
    %786 = vmatpush.msra.mxu0 %v700
    %787 = vmatpush.msra.mxu0 %v696
    %788 = vmatpush.msra.mxu0 %v692
    %789 = vmatpush.msra.mxu0 %v688
    %790 = vmatpush.msra.mxu0 %v684
    %791 = vmatpush.msra.mxu0 %v680
    %792 = vmatpush.msra.mxu0 %v676
    %793 = vmatpush.msra.mxu0 %v672
    %794 = vmatpush.msra.mxu0 %v668
    %795 = vmatpush.msra.mxu0 %v664
    %796 = vmatpush.msra.mxu0 %v660
    %797 = vmatmul.f32.gmra.mxu0 %v653
    %v798 = vpop.f32.mrf.mxu0
    %v799 = vadd.f32 0.0, %v798
    %800 = vdwg.mxu0
    %v805 = vrot.slane %v759, 7
    %v806 = vrot.slane %v779, 6
    %v807 = vrot.slane %v799, 5
    %v808 = vsel %vm413, %v739, %v805
    %v809 = vsel %vm415, %v806, %v807
    %v810 = vsel %vm417, %v808, %v809
    %v812 = vadd.f32 %v656, %v810
    %v813 = vxor.u32 %v812, 2147483648
    %v814 = vmul.f32 %v813, 1.442695
    %v815 = vpow.pop %v814
    %v816 = vadd.f32 %v815, 1.0
    %v817 = vrcp.pop %v816
    %v818 = vmul.f32 %v816, %v817
    %v819 = vsub.f32 1.0, %v818
    %v820 = vmul.f32 %v817, %v819
    %v821 = vadd.f32 %v817, %v820
    %vm822 = vweird.f32 %v816
    %vm823 = vweird.f32 %v817
    %vm824 = vmor %vm822, %vm823
    %v825 = vsel %vm824, %v817, %v821
    %v826 = vand.u32 2147483647, %v816
    %vm827 = vcmp.eq.f32.partialorder %v826, 8.507059e+37
    %v828 = vand.u32 %v816, 2147483648
    %v829 = vor.u32 1.1754944e-38, %v828
    %v830 = vsel %vm827, %v829, %v825
    %v831 = vmul.f32 1.0, %v830
    %v833 = vrot.slane %v812, 3
    %v835 = vtanh.pop %v833
    %v837 = vrot.slane %v831, 1
    %v839 = vmul.f32 %v837, %v654
    %v840 = vmul.f32 %v831, %v835
    %v841 = vadd.f32 %v839, %v840
    %v842 = vtanh.pop %v841
    %v843 = vrot.slane %v831, 2
    %v845 = vmul.f32 %v843, %v842
    %846 = vst [vmem:[#allocation5] sm:$0x1] %v841
    %847 = vst [vmem:[#allocation4] sm:$0x1] %v845
    %848 = vst [vmem:[#allocation3 + $0x2] sm:$0x1] %v845
    %v849 = vld [vmem:[#allocation4] sm:$0x1]
    %v850 = vld [vmem:[#allocation5] sm:$0x1]
    %s851 = scalar_lea.vmem [#allocation2], 3
    %v852 = vld [vmem:[%s851] ss:$8 sm:$0xf]
    %v853 = vld [vmem:[#allocation11] sm:$0xff]
    %v854 = vld [vmem:[#allocation11 + $0x8] sm:$0xff]
    %v855 = vld [vmem:[#allocation11 + $0x10] sm:$0xff]
    %v856 = vld [vmem:[#allocation11 + $0x18] sm:$0xff]
    %v857 = vld [vmem:[#allocation11 + $0x20] sm:$0xff]
    %v858 = vld [vmem:[#allocation11 + $0x28] sm:$0xff]
    %v859 = vld [vmem:[#allocation11 + $0x30] sm:$0xff]
    %v860 = vld [vmem:[#allocation11 + $0x38] sm:$0xff]
    %v861 = vld [vmem:[#allocation11 + $0x40] sm:$0xff]
    %v862 = vld [vmem:[#allocation11 + $0x48] sm:$0xff]
    %v863 = vld [vmem:[#allocation11 + $0x50] sm:$0xff]
    %v864 = vld [vmem:[#allocation11 + $0x58] sm:$0xff]
    %v865 = vld [vmem:[#allocation11 + $0x60] sm:$0xff]
    %v866 = vld [vmem:[#allocation11 + $0x68] sm:$0xff]
    %v867 = vld [vmem:[#allocation11 + $0x70] sm:$0xff]
    %v868 = vld [vmem:[#allocation11 + $0x78] sm:$0xff]
    %v869 = vld [vmem:[#allocation11 + $0x80] sm:$0xff]
    %v870 = vld [vmem:[#allocation11 + $0x88] sm:$0xff]
    %v871 = vld [vmem:[#allocation11 + $0x90] sm:$0xff]
    %v872 = vld [vmem:[#allocation11 + $0x98] sm:$0xff]
    %v873 = vld [vmem:[#allocation11 + $0xa0] sm:$0xff]
    %v874 = vld [vmem:[#allocation11 + $0xa8] sm:$0xff]
    %v875 = vld [vmem:[#allocation11 + $0xb0] sm:$0xff]
    %v876 = vld [vmem:[#allocation11 + $0xb8] sm:$0xff]
    %v877 = vld [vmem:[#allocation11 + $0xc0] sm:$0xff]
    %v878 = vld [vmem:[#allocation11 + $0xc8] sm:$0xff]
    %v879 = vld [vmem:[#allocation11 + $0xd0] sm:$0xff]
    %v880 = vld [vmem:[#allocation11 + $0xd8] sm:$0xff]
    %v881 = vld [vmem:[#allocation11 + $0xe0] sm:$0xff]
    %v882 = vld [vmem:[#allocation11 + $0xe8] sm:$0xff]
    %v883 = vld [vmem:[#allocation11 + $0xf0] sm:$0xff]
    %v884 = vld [vmem:[#allocation11 + $0xf8] sm:$0xff]
    %v885 = vld [vmem:[#allocation11 + $0x100] sm:$0xff]
    %v886 = vld [vmem:[#allocation11 + $0x108] sm:$0xff]
    %v887 = vld [vmem:[#allocation11 + $0x110] sm:$0xff]
    %v888 = vld [vmem:[#allocation11 + $0x118] sm:$0xff]
    %v889 = vld [vmem:[#allocation11 + $0x120] sm:$0xff]
    %v890 = vld [vmem:[#allocation11 + $0x128] sm:$0xff]
    %v891 = vld [vmem:[#allocation11 + $0x130] sm:$0xff]
    %v892 = vld [vmem:[#allocation11 + $0x138] sm:$0xff]
    %v893 = vld [vmem:[#allocation11 + $0x140] sm:$0xff]
    %v894 = vld [vmem:[#allocation11 + $0x148] sm:$0xff]
    %v895 = vld [vmem:[#allocation11 + $0x150] sm:$0xff]
    %v896 = vld [vmem:[#allocation11 + $0x158] sm:$0xff]
    %v897 = vld [vmem:[#allocation11 + $0x160] sm:$0xff]
    %v898 = vld [vmem:[#allocation11 + $0x168] sm:$0xff]
    %v899 = vld [vmem:[#allocation11 + $0x170] sm:$0xff]
    %v900 = vld [vmem:[#allocation11 + $0x178] sm:$0xff]
    %v901 = vld [vmem:[#allocation11 + $0x180] sm:$0xff]
    %v902 = vld [vmem:[#allocation11 + $0x188] sm:$0xff]
    %v903 = vld [vmem:[#allocation11 + $0x190] sm:$0xff]
    %v904 = vld [vmem:[#allocation11 + $0x198] sm:$0xff]
    %v905 = vld [vmem:[#allocation11 + $0x1a0] sm:$0xff]
    %v906 = vld [vmem:[#allocation11 + $0x1a8] sm:$0xff]
    %v907 = vld [vmem:[#allocation11 + $0x1b0] sm:$0xff]
    %v908 = vld [vmem:[#allocation11 + $0x1b8] sm:$0xff]
    %v909 = vld [vmem:[#allocation11 + $0x1c0] sm:$0xff]
    %v910 = vld [vmem:[#allocation11 + $0x1c8] sm:$0xff]
    %v911 = vld [vmem:[#allocation11 + $0x1d0] sm:$0xff]
    %v912 = vld [vmem:[#allocation11 + $0x1d8] sm:$0xff]
    %v913 = vld [vmem:[#allocation11 + $0x1e0] sm:$0xff]
    %v914 = vld [vmem:[#allocation11 + $0x1e8] sm:$0xff]
    %v915 = vld [vmem:[#allocation11 + $0x1f0] sm:$0xff]
    %v916 = vld [vmem:[#allocation11 + $0x1f8] sm:$0xff]
    %917 = vmatpush.msra.mxu0 %v913
    %918 = vmatpush.msra.mxu0 %v909
    %919 = vmatpush.msra.mxu0 %v905
    %920 = vmatpush.msra.mxu0 %v901
    %921 = vmatpush.msra.mxu0 %v897
    %922 = vmatpush.msra.mxu0 %v893
    %923 = vmatpush.msra.mxu0 %v889
    %924 = vmatpush.msra.mxu0 %v885
    %925 = vmatpush.msra.mxu0 %v881
    %926 = vmatpush.msra.mxu0 %v877
    %927 = vmatpush.msra.mxu0 %v873
    %928 = vmatpush.msra.mxu0 %v869
    %929 = vmatpush.msra.mxu0 %v865
    %930 = vmatpush.msra.mxu0 %v861
    %931 = vmatpush.msra.mxu0 %v857
    %932 = vmatpush.msra.mxu0 %v853
    %933 = vmatmul.f32.gmra.mxu0 %v849
    %v934 = vpop.f32.mrf.mxu0
    %v935 = vadd.f32 0.0, %v934
    %936 = vdwg.mxu0
    %937 = vmatpush.msra.mxu0 %v914
    %938 = vmatpush.msra.mxu0 %v910
    %939 = vmatpush.msra.mxu0 %v906
    %940 = vmatpush.msra.mxu0 %v902
    %941 = vmatpush.msra.mxu0 %v898
    %942 = vmatpush.msra.mxu0 %v894
    %943 = vmatpush.msra.mxu0 %v890
    %944 = vmatpush.msra.mxu0 %v886
    %945 = vmatpush.msra.mxu0 %v882
    %946 = vmatpush.msra.mxu0 %v878
    %947 = vmatpush.msra.mxu0 %v874
    %948 = vmatpush.msra.mxu0 %v870
    %949 = vmatpush.msra.mxu0 %v866
    %950 = vmatpush.msra.mxu0 %v862
    %951 = vmatpush.msra.mxu0 %v858
    %952 = vmatpush.msra.mxu0 %v854
    %953 = vmatmul.f32.gmra.mxu0 %v849
    %v954 = vpop.f32.mrf.mxu0
    %v955 = vadd.f32 0.0, %v954
    %956 = vdwg.mxu0
    %957 = vmatpush.msra.mxu0 %v915
    %958 = vmatpush.msra.mxu0 %v911
    %959 = vmatpush.msra.mxu0 %v907
    %960 = vmatpush.msra.mxu0 %v903
    %961 = vmatpush.msra.mxu0 %v899
    %962 = vmatpush.msra.mxu0 %v895
    %963 = vmatpush.msra.mxu0 %v891
    %964 = vmatpush.msra.mxu0 %v887
    %965 = vmatpush.msra.mxu0 %v883
    %966 = vmatpush.msra.mxu0 %v879
    %967 = vmatpush.msra.mxu0 %v875
    %968 = vmatpush.msra.mxu0 %v871
    %969 = vmatpush.msra.mxu0 %v867
    %970 = vmatpush.msra.mxu0 %v863
    %971 = vmatpush.msra.mxu0 %v859
    %972 = vmatpush.msra.mxu0 %v855
    %973 = vmatmul.f32.gmra.mxu0 %v849
    %v974 = vpop.f32.mrf.mxu0
    %v975 = vadd.f32 0.0, %v974
    %976 = vdwg.mxu0
    %977 = vmatpush.msra.mxu0 %v916
    %978 = vmatpush.msra.mxu0 %v912
    %979 = vmatpush.msra.mxu0 %v908
    %980 = vmatpush.msra.mxu0 %v904
    %981 = vmatpush.msra.mxu0 %v900
    %982 = vmatpush.msra.mxu0 %v896
    %983 = vmatpush.msra.mxu0 %v892
    %984 = vmatpush.msra.mxu0 %v888
    %985 = vmatpush.msra.mxu0 %v884
    %986 = vmatpush.msra.mxu0 %v880
    %987 = vmatpush.msra.mxu0 %v876
    %988 = vmatpush.msra.mxu0 %v872
    %989 = vmatpush.msra.mxu0 %v868
    %990 = vmatpush.msra.mxu0 %v864
    %991 = vmatpush.msra.mxu0 %v860
    %992 = vmatpush.msra.mxu0 %v856
    %993 = vmatmul.f32.gmra.mxu0 %v849
    %v994 = vpop.f32.mrf.mxu0
    %v995 = vadd.f32 0.0, %v994
    %996 = vdwg.mxu0
    %v1001 = vrot.slane %v955, 7
    %v1002 = vrot.slane %v975, 6
    %v1003 = vrot.slane %v995, 5
    %v1004 = vsel %vm413, %v935, %v1001
    %v1005 = vsel %vm415, %v1002, %v1003
    %v1006 = vsel %vm417, %v1004, %v1005
    %v1008 = vadd.f32 %v852, %v1006
    %v1009 = vxor.u32 %v1008, 2147483648
    %v1010 = vmul.f32 %v1009, 1.442695
    %v1011 = vpow.pop %v1010
    %v1012 = vadd.f32 %v1011, 1.0
    %v1013 = vrcp.pop %v1012
    %v1014 = vmul.f32 %v1012, %v1013
    %v1015 = vsub.f32 1.0, %v1014
    %v1016 = vmul.f32 %v1013, %v1015
    %v1017 = vadd.f32 %v1013, %v1016
    %vm1018 = vweird.f32 %v1012
    %vm1019 = vweird.f32 %v1013
    %vm1020 = vmor %vm1018, %vm1019
    %v1021 = vsel %vm1020, %v1013, %v1017
    %v1022 = vand.u32 2147483647, %v1012
    %vm1023 = vcmp.eq.f32.partialorder %v1022, 8.507059e+37
    %v1024 = vand.u32 %v1012, 2147483648
    %v1025 = vor.u32 1.1754944e-38, %v1024
    %v1026 = vsel %vm1023, %v1025, %v1021
    %v1027 = vmul.f32 1.0, %v1026
    %v1029 = vrot.slane %v1008, 3
    %v1031 = vtanh.pop %v1029
    %v1033 = vrot.slane %v1027, 1
    %v1035 = vmul.f32 %v1033, %v850
    %v1036 = vmul.f32 %v1027, %v1031
    %v1037 = vadd.f32 %v1035, %v1036
    %v1038 = vtanh.pop %v1037
    %v1039 = vrot.slane %v1027, 2
    %v1041 = vmul.f32 %v1039, %v1038
    %1042 = vst [vmem:[#allocation5] sm:$0x1] %v1037
    %1043 = vst [vmem:[#allocation4] sm:$0x1] %v1041
    %1044 = vst [vmem:[#allocation3 + $0x3] sm:$0x1] %v1041
    %v1045 = vld [vmem:[#allocation4] sm:$0x1]
    %v1046 = vld [vmem:[#allocation5] sm:$0x1]
    %s1047 = scalar_lea.vmem [#allocation2], 4
    %v1048 = vld [vmem:[%s1047] ss:$8 sm:$0xf]
    %v1049 = vld [vmem:[#allocation11] sm:$0xff]
    %v1050 = vld [vmem:[#allocation11 + $0x8] sm:$0xff]
    %v1051 = vld [vmem:[#allocation11 + $0x10] sm:$0xff]
    %v1052 = vld [vmem:[#allocation11 + $0x18] sm:$0xff]
    %v1053 = vld [vmem:[#allocation11 + $0x20] sm:$0xff]
    %v1054 = vld [vmem:[#allocation11 + $0x28] sm:$0xff]
    %v1055 = vld [vmem:[#allocation11 + $0x30] sm:$0xff]
    %v1056 = vld [vmem:[#allocation11 + $0x38] sm:$0xff]
    %v1057 = vld [vmem:[#allocation11 + $0x40] sm:$0xff]
    %v1058 = vld [vmem:[#allocation11 + $0x48] sm:$0xff]
    %v1059 = vld [vmem:[#allocation11 + $0x50] sm:$0xff]
    %v1060 = vld [vmem:[#allocation11 + $0x58] sm:$0xff]
    %v1061 = vld [vmem:[#allocation11 + $0x60] sm:$0xff]
    %v1062 = vld [vmem:[#allocation11 + $0x68] sm:$0xff]
    %v1063 = vld [vmem:[#allocation11 + $0x70] sm:$0xff]
    %v1064 = vld [vmem:[#allocation11 + $0x78] sm:$0xff]
    %v1065 = vld [vmem:[#allocation11 + $0x80] sm:$0xff]
    %v1066 = vld [vmem:[#allocation11 + $0x88] sm:$0xff]
    %v1067 = vld [vmem:[#allocation11 + $0x90] sm:$0xff]
    %v1068 = vld [vmem:[#allocation11 + $0x98] sm:$0xff]
    %v1069 = vld [vmem:[#allocation11 + $0xa0] sm:$0xff]
    %v1070 = vld [vmem:[#allocation11 + $0xa8] sm:$0xff]
    %v1071 = vld [vmem:[#allocation11 + $0xb0] sm:$0xff]
    %v1072 = vld [vmem:[#allocation11 + $0xb8] sm:$0xff]
    %v1073 = vld [vmem:[#allocation11 + $0xc0] sm:$0xff]
    %v1074 = vld [vmem:[#allocation11 + $0xc8] sm:$0xff]
    %v1075 = vld [vmem:[#allocation11 + $0xd0] sm:$0xff]
    %v1076 = vld [vmem:[#allocation11 + $0xd8] sm:$0xff]
    %v1077 = vld [vmem:[#allocation11 + $0xe0] sm:$0xff]
    %v1078 = vld [vmem:[#allocation11 + $0xe8] sm:$0xff]
    %v1079 = vld [vmem:[#allocation11 + $0xf0] sm:$0xff]
    %v1080 = vld [vmem:[#allocation11 + $0xf8] sm:$0xff]
    %v1081 = vld [vmem:[#allocation11 + $0x100] sm:$0xff]
    %v1082 = vld [vmem:[#allocation11 + $0x108] sm:$0xff]
    %v1083 = vld [vmem:[#allocation11 + $0x110] sm:$0xff]
    %v1084 = vld [vmem:[#allocation11 + $0x118] sm:$0xff]
    %v1085 = vld [vmem:[#allocation11 + $0x120] sm:$0xff]
    %v1086 = vld [vmem:[#allocation11 + $0x128] sm:$0xff]
    %v1087 = vld [vmem:[#allocation11 + $0x130] sm:$0xff]
    %v1088 = vld [vmem:[#allocation11 + $0x138] sm:$0xff]
    %v1089 = vld [vmem:[#allocation11 + $0x140] sm:$0xff]
    %v1090 = vld [vmem:[#allocation11 + $0x148] sm:$0xff]
    %v1091 = vld [vmem:[#allocation11 + $0x150] sm:$0xff]
    %v1092 = vld [vmem:[#allocation11 + $0x158] sm:$0xff]
    %v1093 = vld [vmem:[#allocation11 + $0x160] sm:$0xff]
    %v1094 = vld [vmem:[#allocation11 + $0x168] sm:$0xff]
    %v1095 = vld [vmem:[#allocation11 + $0x170] sm:$0xff]
    %v1096 = vld [vmem:[#allocation11 + $0x178] sm:$0xff]
    %v1097 = vld [vmem:[#allocation11 + $0x180] sm:$0xff]
    %v1098 = vld [vmem:[#allocation11 + $0x188] sm:$0xff]
    %v1099 = vld [vmem:[#allocation11 + $0x190] sm:$0xff]
    %v1100 = vld [vmem:[#allocation11 + $0x198] sm:$0xff]
    %v1101 = vld [vmem:[#allocation11 + $0x1a0] sm:$0xff]
    %v1102 = vld [vmem:[#allocation11 + $0x1a8] sm:$0xff]
    %v1103 = vld [vmem:[#allocation11 + $0x1b0] sm:$0xff]
    %v1104 = vld [vmem:[#allocation11 + $0x1b8] sm:$0xff]
    %v1105 = vld [vmem:[#allocation11 + $0x1c0] sm:$0xff]
    %v1106 = vld [vmem:[#allocation11 + $0x1c8] sm:$0xff]
    %v1107 = vld [vmem:[#allocation11 + $0x1d0] sm:$0xff]
    %v1108 = vld [vmem:[#allocation11 + $0x1d8] sm:$0xff]
    %v1109 = vld [vmem:[#allocation11 + $0x1e0] sm:$0xff]
    %v1110 = vld [vmem:[#allocation11 + $0x1e8] sm:$0xff]
    %v1111 = vld [vmem:[#allocation11 + $0x1f0] sm:$0xff]
    %v1112 = vld [vmem:[#allocation11 + $0x1f8] sm:$0xff]
    %1113 = vmatpush.msra.mxu0 %v1109
    %1114 = vmatpush.msra.mxu0 %v1105
    %1115 = vmatpush.msra.mxu0 %v1101
    %1116 = vmatpush.msra.mxu0 %v1097
    %1117 = vmatpush.msra.mxu0 %v1093
    %1118 = vmatpush.msra.mxu0 %v1089
    %1119 = vmatpush.msra.mxu0 %v1085
    %1120 = vmatpush.msra.mxu0 %v1081
    %1121 = vmatpush.msra.mxu0 %v1077
    %1122 = vmatpush.msra.mxu0 %v1073
    %1123 = vmatpush.msra.mxu0 %v1069
    %1124 = vmatpush.msra.mxu0 %v1065
    %1125 = vmatpush.msra.mxu0 %v1061
    %1126 = vmatpush.msra.mxu0 %v1057
    %1127 = vmatpush.msra.mxu0 %v1053
    %1128 = vmatpush.msra.mxu0 %v1049
    %1129 = vmatmul.f32.gmra.mxu0 %v1045
    %v1130 = vpop.f32.mrf.mxu0
    %v1131 = vadd.f32 0.0, %v1130
    %1132 = vdwg.mxu0
    %1133 = vmatpush.msra.mxu0 %v1110
    %1134 = vmatpush.msra.mxu0 %v1106
    %1135 = vmatpush.msra.mxu0 %v1102
    %1136 = vmatpush.msra.mxu0 %v1098
    %1137 = vmatpush.msra.mxu0 %v1094
    %1138 = vmatpush.msra.mxu0 %v1090
    %1139 = vmatpush.msra.mxu0 %v1086
    %1140 = vmatpush.msra.mxu0 %v1082
    %1141 = vmatpush.msra.mxu0 %v1078
    %1142 = vmatpush.msra.mxu0 %v1074
    %1143 = vmatpush.msra.mxu0 %v1070
    %1144 = vmatpush.msra.mxu0 %v1066
    %1145 = vmatpush.msra.mxu0 %v1062
    %1146 = vmatpush.msra.mxu0 %v1058
    %1147 = vmatpush.msra.mxu0 %v1054
    %1148 = vmatpush.msra.mxu0 %v1050
    %1149 = vmatmul.f32.gmra.mxu0 %v1045
    %v1150 = vpop.f32.mrf.mxu0
    %v1151 = vadd.f32 0.0, %v1150
    %1152 = vdwg.mxu0
    %1153 = vmatpush.msra.mxu0 %v1111
    %1154 = vmatpush.msra.mxu0 %v1107
    %1155 = vmatpush.msra.mxu0 %v1103
    %1156 = vmatpush.msra.mxu0 %v1099
    %1157 = vmatpush.msra.mxu0 %v1095
    %1158 = vmatpush.msra.mxu0 %v1091
    %1159 = vmatpush.msra.mxu0 %v1087
    %1160 = vmatpush.msra.mxu0 %v1083
    %1161 = vmatpush.msra.mxu0 %v1079
    %1162 = vmatpush.msra.mxu0 %v1075
    %1163 = vmatpush.msra.mxu0 %v1071
    %1164 = vmatpush.msra.mxu0 %v1067
    %1165 = vmatpush.msra.mxu0 %v1063
    %1166 = vmatpush.msra.mxu0 %v1059
    %1167 = vmatpush.msra.mxu0 %v1055
    %1168 = vmatpush.msra.mxu0 %v1051
    %1169 = vmatmul.f32.gmra.mxu0 %v1045
    %v1170 = vpop.f32.mrf.mxu0
    %v1171 = vadd.f32 0.0, %v1170
    %1172 = vdwg.mxu0
    %1173 = vmatpush.msra.mxu0 %v1112
    %1174 = vmatpush.msra.mxu0 %v1108
    %1175 = vmatpush.msra.mxu0 %v1104
    %1176 = vmatpush.msra.mxu0 %v1100
    %1177 = vmatpush.msra.mxu0 %v1096
    %1178 = vmatpush.msra.mxu0 %v1092
    %1179 = vmatpush.msra.mxu0 %v1088
    %1180 = vmatpush.msra.mxu0 %v1084
    %1181 = vmatpush.msra.mxu0 %v1080
    %1182 = vmatpush.msra.mxu0 %v1076
    %1183 = vmatpush.msra.mxu0 %v1072
    %1184 = vmatpush.msra.mxu0 %v1068
    %1185 = vmatpush.msra.mxu0 %v1064
    %1186 = vmatpush.msra.mxu0 %v1060
    %1187 = vmatpush.msra.mxu0 %v1056
    %1188 = vmatpush.msra.mxu0 %v1052
    %1189 = vmatmul.f32.gmra.mxu0 %v1045
    %v1190 = vpop.f32.mrf.mxu0
    %v1191 = vadd.f32 0.0, %v1190
    %1192 = vdwg.mxu0
    %v1197 = vrot.slane %v1151, 7
    %v1198 = vrot.slane %v1171, 6
    %v1199 = vrot.slane %v1191, 5
    %v1200 = vsel %vm413, %v1131, %v1197
    %v1201 = vsel %vm415, %v1198, %v1199
    %v1202 = vsel %vm417, %v1200, %v1201
    %v1204 = vadd.f32 %v1048, %v1202
    %v1205 = vxor.u32 %v1204, 2147483648
    %v1206 = vmul.f32 %v1205, 1.442695
    %v1207 = vpow.pop %v1206
    %v1208 = vadd.f32 %v1207, 1.0
    %v1209 = vrcp.pop %v1208
    %v1210 = vmul.f32 %v1208, %v1209
    %v1211 = vsub.f32 1.0, %v1210
    %v1212 = vmul.f32 %v1209, %v1211
    %v1213 = vadd.f32 %v1209, %v1212
    %vm1214 = vweird.f32 %v1208
    %vm1215 = vweird.f32 %v1209
    %vm1216 = vmor %vm1214, %vm1215
    %v1217 = vsel %vm1216, %v1209, %v1213
    %v1218 = vand.u32 2147483647, %v1208
    %vm1219 = vcmp.eq.f32.partialorder %v1218, 8.507059e+37
    %v1220 = vand.u32 %v1208, 2147483648
    %v1221 = vor.u32 1.1754944e-38, %v1220
    %v1222 = vsel %vm1219, %v1221, %v1217
    %v1223 = vmul.f32 1.0, %v1222
    %v1225 = vrot.slane %v1204, 3
    %v1227 = vtanh.pop %v1225
    %v1229 = vrot.slane %v1223, 1
    %v1231 = vmul.f32 %v1229, %v1046
    %v1232 = vmul.f32 %v1223, %v1227
    %v1233 = vadd.f32 %v1231, %v1232
    %v1234 = vtanh.pop %v1233
    %v1235 = vrot.slane %v1223, 2
    %v1237 = vmul.f32 %v1235, %v1234
    %1238 = vst [vmem:[#allocation5] sm:$0x1] %v1233
    %1239 = vst [vmem:[#allocation4] sm:$0x1] %v1237
    %1240 = vst [vmem:[#allocation3 + $0x4] sm:$0x1] %v1237
    %v1241 = vld [vmem:[#allocation4] sm:$0x1]
    %v1242 = vld [vmem:[#allocation5] sm:$0x1]
    %s1243 = scalar_lea.vmem [#allocation2], 5
    %v1244 = vld [vmem:[%s1243] ss:$8 sm:$0xf]
    %v1245 = vld [vmem:[#allocation11] sm:$0xff]
    %v1246 = vld [vmem:[#allocation11 + $0x8] sm:$0xff]
    %v1247 = vld [vmem:[#allocation11 + $0x10] sm:$0xff]
    %v1248 = vld [vmem:[#allocation11 + $0x18] sm:$0xff]
    %v1249 = vld [vmem:[#allocation11 + $0x20] sm:$0xff]
    %v1250 = vld [vmem:[#allocation11 + $0x28] sm:$0xff]
    %v1251 = vld [vmem:[#allocation11 + $0x30] sm:$0xff]
    %v1252 = vld [vmem:[#allocation11 + $0x38] sm:$0xff]
    %v1253 = vld [vmem:[#allocation11 + $0x40] sm:$0xff]
    %v1254 = vld [vmem:[#allocation11 + $0x48] sm:$0xff]
    %v1255 = vld [vmem:[#allocation11 + $0x50] sm:$0xff]
    %v1256 = vld [vmem:[#allocation11 + $0x58] sm:$0xff]
    %v1257 = vld [vmem:[#allocation11 + $0x60] sm:$0xff]
    %v1258 = vld [vmem:[#allocation11 + $0x68] sm:$0xff]
    %v1259 = vld [vmem:[#allocation11 + $0x70] sm:$0xff]
    %v1260 = vld [vmem:[#allocation11 + $0x78] sm:$0xff]
    %v1261 = vld [vmem:[#allocation11 + $0x80] sm:$0xff]
    %v1262 = vld [vmem:[#allocation11 + $0x88] sm:$0xff]
    %v1263 = vld [vmem:[#allocation11 + $0x90] sm:$0xff]
    %v1264 = vld [vmem:[#allocation11 + $0x98] sm:$0xff]
    %v1265 = vld [vmem:[#allocation11 + $0xa0] sm:$0xff]
    %v1266 = vld [vmem:[#allocation11 + $0xa8] sm:$0xff]
    %v1267 = vld [vmem:[#allocation11 + $0xb0] sm:$0xff]
    %v1268 = vld [vmem:[#allocation11 + $0xb8] sm:$0xff]
    %v1269 = vld [vmem:[#allocation11 + $0xc0] sm:$0xff]
    %v1270 = vld [vmem:[#allocation11 + $0xc8] sm:$0xff]
    %v1271 = vld [vmem:[#allocation11 + $0xd0] sm:$0xff]
    %v1272 = vld [vmem:[#allocation11 + $0xd8] sm:$0xff]
    %v1273 = vld [vmem:[#allocation11 + $0xe0] sm:$0xff]
    %v1274 = vld [vmem:[#allocation11 + $0xe8] sm:$0xff]
    %v1275 = vld [vmem:[#allocation11 + $0xf0] sm:$0xff]
    %v1276 = vld [vmem:[#allocation11 + $0xf8] sm:$0xff]
    %v1277 = vld [vmem:[#allocation11 + $0x100] sm:$0xff]
    %v1278 = vld [vmem:[#allocation11 + $0x108] sm:$0xff]
    %v1279 = vld [vmem:[#allocation11 + $0x110] sm:$0xff]
    %v1280 = vld [vmem:[#allocation11 + $0x118] sm:$0xff]
    %v1281 = vld [vmem:[#allocation11 + $0x120] sm:$0xff]
    %v1282 = vld [vmem:[#allocation11 + $0x128] sm:$0xff]
    %v1283 = vld [vmem:[#allocation11 + $0x130] sm:$0xff]
    %v1284 = vld [vmem:[#allocation11 + $0x138] sm:$0xff]
    %v1285 = vld [vmem:[#allocation11 + $0x140] sm:$0xff]
    %v1286 = vld [vmem:[#allocation11 + $0x148] sm:$0xff]
    %v1287 = vld [vmem:[#allocation11 + $0x150] sm:$0xff]
    %v1288 = vld [vmem:[#allocation11 + $0x158] sm:$0xff]
    %v1289 = vld [vmem:[#allocation11 + $0x160] sm:$0xff]
    %v1290 = vld [vmem:[#allocation11 + $0x168] sm:$0xff]
    %v1291 = vld [vmem:[#allocation11 + $0x170] sm:$0xff]
    %v1292 = vld [vmem:[#allocation11 + $0x178] sm:$0xff]
    %v1293 = vld [vmem:[#allocation11 + $0x180] sm:$0xff]
    %v1294 = vld [vmem:[#allocation11 + $0x188] sm:$0xff]
    %v1295 = vld [vmem:[#allocation11 + $0x190] sm:$0xff]
    %v1296 = vld [vmem:[#allocation11 + $0x198] sm:$0xff]
    %v1297 = vld [vmem:[#allocation11 + $0x1a0] sm:$0xff]
    %v1298 = vld [vmem:[#allocation11 + $0x1a8] sm:$0xff]
    %v1299 = vld [vmem:[#allocation11 + $0x1b0] sm:$0xff]
    %v1300 = vld [vmem:[#allocation11 + $0x1b8] sm:$0xff]
    %v1301 = vld [vmem:[#allocation11 + $0x1c0] sm:$0xff]
    %v1302 = vld [vmem:[#allocation11 + $0x1c8] sm:$0xff]
    %v1303 = vld [vmem:[#allocation11 + $0x1d0] sm:$0xff]
    %v1304 = vld [vmem:[#allocation11 + $0x1d8] sm:$0xff]
    %v1305 = vld [vmem:[#allocation11 + $0x1e0] sm:$0xff]
    %v1306 = vld [vmem:[#allocation11 + $0x1e8] sm:$0xff]
    %v1307 = vld [vmem:[#allocation11 + $0x1f0] sm:$0xff]
    %v1308 = vld [vmem:[#allocation11 + $0x1f8] sm:$0xff]
    %1309 = vmatpush.msra.mxu0 %v1305
    %1310 = vmatpush.msra.mxu0 %v1301
    %1311 = vmatpush.msra.mxu0 %v1297
    %1312 = vmatpush.msra.mxu0 %v1293
    %1313 = vmatpush.msra.mxu0 %v1289
    %1314 = vmatpush.msra.mxu0 %v1285
    %1315 = vmatpush.msra.mxu0 %v1281
    %1316 = vmatpush.msra.mxu0 %v1277
    %1317 = vmatpush.msra.mxu0 %v1273
    %1318 = vmatpush.msra.mxu0 %v1269
    %1319 = vmatpush.msra.mxu0 %v1265
    %1320 = vmatpush.msra.mxu0 %v1261
    %1321 = vmatpush.msra.mxu0 %v1257
    %1322 = vmatpush.msra.mxu0 %v1253
    %1323 = vmatpush.msra.mxu0 %v1249
    %1324 = vmatpush.msra.mxu0 %v1245
    %1325 = vmatmul.f32.gmra.mxu0 %v1241
    %v1326 = vpop.f32.mrf.mxu0
    %v1327 = vadd.f32 0.0, %v1326
    %1328 = vdwg.mxu0
    %1329 = vmatpush.msra.mxu0 %v1306
    %1330 = vmatpush.msra.mxu0 %v1302
    %1331 = vmatpush.msra.mxu0 %v1298
    %1332 = vmatpush.msra.mxu0 %v1294
    %1333 = vmatpush.msra.mxu0 %v1290
    %1334 = vmatpush.msra.mxu0 %v1286
    %1335 = vmatpush.msra.mxu0 %v1282
    %1336 = vmatpush.msra.mxu0 %v1278
    %1337 = vmatpush.msra.mxu0 %v1274
    %1338 = vmatpush.msra.mxu0 %v1270
    %1339 = vmatpush.msra.mxu0 %v1266
    %1340 = vmatpush.msra.mxu0 %v1262
    %1341 = vmatpush.msra.mxu0 %v1258
    %1342 = vmatpush.msra.mxu0 %v1254
    %1343 = vmatpush.msra.mxu0 %v1250
    %1344 = vmatpush.msra.mxu0 %v1246
    %1345 = vmatmul.f32.gmra.mxu0 %v1241
    %v1346 = vpop.f32.mrf.mxu0
    %v1347 = vadd.f32 0.0, %v1346
    %1348 = vdwg.mxu0
    %1349 = vmatpush.msra.mxu0 %v1307
    %1350 = vmatpush.msra.mxu0 %v1303
    %1351 = vmatpush.msra.mxu0 %v1299
    %1352 = vmatpush.msra.mxu0 %v1295
    %1353 = vmatpush.msra.mxu0 %v1291
    %1354 = vmatpush.msra.mxu0 %v1287
    %1355 = vmatpush.msra.mxu0 %v1283
    %1356 = vmatpush.msra.mxu0 %v1279
    %1357 = vmatpush.msra.mxu0 %v1275
    %1358 = vmatpush.msra.mxu0 %v1271
    %1359 = vmatpush.msra.mxu0 %v1267
    %1360 = vmatpush.msra.mxu0 %v1263
    %1361 = vmatpush.msra.mxu0 %v1259
    %1362 = vmatpush.msra.mxu0 %v1255
    %1363 = vmatpush.msra.mxu0 %v1251
    %1364 = vmatpush.msra.mxu0 %v1247
    %1365 = vmatmul.f32.gmra.mxu0 %v1241
    %v1366 = vpop.f32.mrf.mxu0
    %v1367 = vadd.f32 0.0, %v1366
    %1368 = vdwg.mxu0
    %1369 = vmatpush.msra.mxu0 %v1308
    %1370 = vmatpush.msra.mxu0 %v1304
    %1371 = vmatpush.msra.mxu0 %v1300
    %1372 = vmatpush.msra.mxu0 %v1296
    %1373 = vmatpush.msra.mxu0 %v1292
    %1374 = vmatpush.msra.mxu0 %v1288
    %1375 = vmatpush.msra.mxu0 %v1284
    %1376 = vmatpush.msra.mxu0 %v1280
    %1377 = vmatpush.msra.mxu0 %v1276
    %1378 = vmatpush.msra.mxu0 %v1272
    %1379 = vmatpush.msra.mxu0 %v1268
    %1380 = vmatpush.msra.mxu0 %v1264
    %1381 = vmatpush.msra.mxu0 %v1260
    %1382 = vmatpush.msra.mxu0 %v1256
    %1383 = vmatpush.msra.mxu0 %v1252
    %1384 = vmatpush.msra.mxu0 %v1248
    %1385 = vmatmul.f32.gmra.mxu0 %v1241
    %v1386 = vpop.f32.mrf.mxu0
    %v1387 = vadd.f32 0.0, %v1386
    %1388 = vdwg.mxu0
    %v1393 = vrot.slane %v1347, 7
    %v1394 = vrot.slane %v1367, 6
    %v1395 = vrot.slane %v1387, 5
    %v1396 = vsel %vm413, %v1327, %v1393
    %v1397 = vsel %vm415, %v1394, %v1395
    %v1398 = vsel %vm417, %v1396, %v1397
    %v1400 = vadd.f32 %v1244, %v1398
    %v1401 = vxor.u32 %v1400, 2147483648
    %v1402 = vmul.f32 %v1401, 1.442695
    %v1403 = vpow.pop %v1402
    %v1404 = vadd.f32 %v1403, 1.0
    %v1405 = vrcp.pop %v1404
    %v1406 = vmul.f32 %v1404, %v1405
    %v1407 = vsub.f32 1.0, %v1406
    %v1408 = vmul.f32 %v1405, %v1407
    %v1409 = vadd.f32 %v1405, %v1408
    %vm1410 = vweird.f32 %v1404
    %vm1411 = vweird.f32 %v1405
    %vm1412 = vmor %vm1410, %vm1411
    %v1413 = vsel %vm1412, %v1405, %v1409
    %v1414 = vand.u32 2147483647, %v1404
    %vm1415 = vcmp.eq.f32.partialorder %v1414, 8.507059e+37
    %v1416 = vand.u32 %v1404, 2147483648
    %v1417 = vor.u32 1.1754944e-38, %v1416
    %v1418 = vsel %vm1415, %v1417, %v1413
    %v1419 = vmul.f32 1.0, %v1418
    %v1421 = vrot.slane %v1400, 3
    %v1423 = vtanh.pop %v1421
    %v1425 = vrot.slane %v1419, 1
    %v1427 = vmul.f32 %v1425, %v1242
    %v1428 = vmul.f32 %v1419, %v1423
    %v1429 = vadd.f32 %v1427, %v1428
    %v1430 = vtanh.pop %v1429
    %v1431 = vrot.slane %v1419, 2
    %v1433 = vmul.f32 %v1431, %v1430
    %1434 = vst [vmem:[#allocation5] sm:$0x1] %v1429
    %1435 = vst [vmem:[#allocation4] sm:$0x1] %v1433
    %1436 = vst [vmem:[#allocation3 + $0x5] sm:$0x1] %v1433
    %v1437 = vld [vmem:[#allocation4] sm:$0x1]
    %v1438 = vld [vmem:[#allocation5] sm:$0x1]
    %s1439 = scalar_lea.vmem [#allocation2], 6
    %v1440 = vld [vmem:[%s1439] ss:$8 sm:$0xf]
    %v1441 = vld [vmem:[#allocation11] sm:$0xff]
    %v1442 = vld [vmem:[#allocation11 + $0x8] sm:$0xff]
    %v1443 = vld [vmem:[#allocation11 + $0x10] sm:$0xff]
    %v1444 = vld [vmem:[#allocation11 + $0x18] sm:$0xff]
    %v1445 = vld [vmem:[#allocation11 + $0x20] sm:$0xff]
    %v1446 = vld [vmem:[#allocation11 + $0x28] sm:$0xff]
    %v1447 = vld [vmem:[#allocation11 + $0x30] sm:$0xff]
    %v1448 = vld [vmem:[#allocation11 + $0x38] sm:$0xff]
    %v1449 = vld [vmem:[#allocation11 + $0x40] sm:$0xff]
    %v1450 = vld [vmem:[#allocation11 + $0x48] sm:$0xff]
    %v1451 = vld [vmem:[#allocation11 + $0x50] sm:$0xff]
    %v1452 = vld [vmem:[#allocation11 + $0x58] sm:$0xff]
    %v1453 = vld [vmem:[#allocation11 + $0x60] sm:$0xff]
    %v1454 = vld [vmem:[#allocation11 + $0x68] sm:$0xff]
    %v1455 = vld [vmem:[#allocation11 + $0x70] sm:$0xff]
    %v1456 = vld [vmem:[#allocation11 + $0x78] sm:$0xff]
    %v1457 = vld [vmem:[#allocation11 + $0x80] sm:$0xff]
    %v1458 = vld [vmem:[#allocation11 + $0x88] sm:$0xff]
    %v1459 = vld [vmem:[#allocation11 + $0x90] sm:$0xff]
    %v1460 = vld [vmem:[#allocation11 + $0x98] sm:$0xff]
    %v1461 = vld [vmem:[#allocation11 + $0xa0] sm:$0xff]
    %v1462 = vld [vmem:[#allocation11 + $0xa8] sm:$0xff]
    %v1463 = vld [vmem:[#allocation11 + $0xb0] sm:$0xff]
    %v1464 = vld [vmem:[#allocation11 + $0xb8] sm:$0xff]
    %v1465 = vld [vmem:[#allocation11 + $0xc0] sm:$0xff]
    %v1466 = vld [vmem:[#allocation11 + $0xc8] sm:$0xff]
    %v1467 = vld [vmem:[#allocation11 + $0xd0] sm:$0xff]
    %v1468 = vld [vmem:[#allocation11 + $0xd8] sm:$0xff]
    %v1469 = vld [vmem:[#allocation11 + $0xe0] sm:$0xff]
    %v1470 = vld [vmem:[#allocation11 + $0xe8] sm:$0xff]
    %v1471 = vld [vmem:[#allocation11 + $0xf0] sm:$0xff]
    %v1472 = vld [vmem:[#allocation11 + $0xf8] sm:$0xff]
    %v1473 = vld [vmem:[#allocation11 + $0x100] sm:$0xff]
    %v1474 = vld [vmem:[#allocation11 + $0x108] sm:$0xff]
    %v1475 = vld [vmem:[#allocation11 + $0x110] sm:$0xff]
    %v1476 = vld [vmem:[#allocation11 + $0x118] sm:$0xff]
    %v1477 = vld [vmem:[#allocation11 + $0x120] sm:$0xff]
    %v1478 = vld [vmem:[#allocation11 + $0x128] sm:$0xff]
    %v1479 = vld [vmem:[#allocation11 + $0x130] sm:$0xff]
    %v1480 = vld [vmem:[#allocation11 + $0x138] sm:$0xff]
    %v1481 = vld [vmem:[#allocation11 + $0x140] sm:$0xff]
    %v1482 = vld [vmem:[#allocation11 + $0x148] sm:$0xff]
    %v1483 = vld [vmem:[#allocation11 + $0x150] sm:$0xff]
    %v1484 = vld [vmem:[#allocation11 + $0x158] sm:$0xff]
    %v1485 = vld [vmem:[#allocation11 + $0x160] sm:$0xff]
    %v1486 = vld [vmem:[#allocation11 + $0x168] sm:$0xff]
    %v1487 = vld [vmem:[#allocation11 + $0x170] sm:$0xff]
    %v1488 = vld [vmem:[#allocation11 + $0x178] sm:$0xff]
    %v1489 = vld [vmem:[#allocation11 + $0x180] sm:$0xff]
    %v1490 = vld [vmem:[#allocation11 + $0x188] sm:$0xff]
    %v1491 = vld [vmem:[#allocation11 + $0x190] sm:$0xff]
    %v1492 = vld [vmem:[#allocation11 + $0x198] sm:$0xff]
    %v1493 = vld [vmem:[#allocation11 + $0x1a0] sm:$0xff]
    %v1494 = vld [vmem:[#allocation11 + $0x1a8] sm:$0xff]
    %v1495 = vld [vmem:[#allocation11 + $0x1b0] sm:$0xff]
    %v1496 = vld [vmem:[#allocation11 + $0x1b8] sm:$0xff]
    %v1497 = vld [vmem:[#allocation11 + $0x1c0] sm:$0xff]
    %v1498 = vld [vmem:[#allocation11 + $0x1c8] sm:$0xff]
    %v1499 = vld [vmem:[#allocation11 + $0x1d0] sm:$0xff]
    %v1500 = vld [vmem:[#allocation11 + $0x1d8] sm:$0xff]
    %v1501 = vld [vmem:[#allocation11 + $0x1e0] sm:$0xff]
    %v1502 = vld [vmem:[#allocation11 + $0x1e8] sm:$0xff]
    %v1503 = vld [vmem:[#allocation11 + $0x1f0] sm:$0xff]
    %v1504 = vld [vmem:[#allocation11 + $0x1f8] sm:$0xff]
    %1505 = vmatpush.msra.mxu0 %v1501
    %1506 = vmatpush.msra.mxu0 %v1497
    %1507 = vmatpush.msra.mxu0 %v1493
    %1508 = vmatpush.msra.mxu0 %v1489
    %1509 = vmatpush.msra.mxu0 %v1485
    %1510 = vmatpush.msra.mxu0 %v1481
    %1511 = vmatpush.msra.mxu0 %v1477
    %1512 = vmatpush.msra.mxu0 %v1473
    %1513 = vmatpush.msra.mxu0 %v1469
    %1514 = vmatpush.msra.mxu0 %v1465
    %1515 = vmatpush.msra.mxu0 %v1461
    %1516 = vmatpush.msra.mxu0 %v1457
    %1517 = vmatpush.msra.mxu0 %v1453
    %1518 = vmatpush.msra.mxu0 %v1449
    %1519 = vmatpush.msra.mxu0 %v1445
    %1520 = vmatpush.msra.mxu0 %v1441
    %1521 = vmatmul.f32.gmra.mxu0 %v1437
    %v1522 = vpop.f32.mrf.mxu0
    %v1523 = vadd.f32 0.0, %v1522
    %1524 = vdwg.mxu0
    %1525 = vmatpush.msra.mxu0 %v1502
    %1526 = vmatpush.msra.mxu0 %v1498
    %1527 = vmatpush.msra.mxu0 %v1494
    %1528 = vmatpush.msra.mxu0 %v1490
    %1529 = vmatpush.msra.mxu0 %v1486
    %1530 = vmatpush.msra.mxu0 %v1482
    %1531 = vmatpush.msra.mxu0 %v1478
    %1532 = vmatpush.msra.mxu0 %v1474
    %1533 = vmatpush.msra.mxu0 %v1470
    %1534 = vmatpush.msra.mxu0 %v1466
    %1535 = vmatpush.msra.mxu0 %v1462
    %1536 = vmatpush.msra.mxu0 %v1458
    %1537 = vmatpush.msra.mxu0 %v1454
    %1538 = vmatpush.msra.mxu0 %v1450
    %1539 = vmatpush.msra.mxu0 %v1446
    %1540 = vmatpush.msra.mxu0 %v1442
    %1541 = vmatmul.f32.gmra.mxu0 %v1437
    %v1542 = vpop.f32.mrf.mxu0
    %v1543 = vadd.f32 0.0, %v1542
    %1544 = vdwg.mxu0
    %1545 = vmatpush.msra.mxu0 %v1503
    %1546 = vmatpush.msra.mxu0 %v1499
    %1547 = vmatpush.msra.mxu0 %v1495
    %1548 = vmatpush.msra.mxu0 %v1491
    %1549 = vmatpush.msra.mxu0 %v1487
    %1550 = vmatpush.msra.mxu0 %v1483
    %1551 = vmatpush.msra.mxu0 %v1479
    %1552 = vmatpush.msra.mxu0 %v1475
    %1553 = vmatpush.msra.mxu0 %v1471
    %1554 = vmatpush.msra.mxu0 %v1467
    %1555 = vmatpush.msra.mxu0 %v1463
    %1556 = vmatpush.msra.mxu0 %v1459
    %1557 = vmatpush.msra.mxu0 %v1455
    %1558 = vmatpush.msra.mxu0 %v1451
    %1559 = vmatpush.msra.mxu0 %v1447
    %1560 = vmatpush.msra.mxu0 %v1443
    %1561 = vmatmul.f32.gmra.mxu0 %v1437
    %v1562 = vpop.f32.mrf.mxu0
    %v1563 = vadd.f32 0.0, %v1562
    %1564 = vdwg.mxu0
    %1565 = vmatpush.msra.mxu0 %v1504
    %1566 = vmatpush.msra.mxu0 %v1500
    %1567 = vmatpush.msra.mxu0 %v1496
    %1568 = vmatpush.msra.mxu0 %v1492
    %1569 = vmatpush.msra.mxu0 %v1488
    %1570 = vmatpush.msra.mxu0 %v1484
    %1571 = vmatpush.msra.mxu0 %v1480
    %1572 = vmatpush.msra.mxu0 %v1476
    %1573 = vmatpush.msra.mxu0 %v1472
    %1574 = vmatpush.msra.mxu0 %v1468
    %1575 = vmatpush.msra.mxu0 %v1464
    %1576 = vmatpush.msra.mxu0 %v1460
    %1577 = vmatpush.msra.mxu0 %v1456
    %1578 = vmatpush.msra.mxu0 %v1452
    %1579 = vmatpush.msra.mxu0 %v1448
    %1580 = vmatpush.msra.mxu0 %v1444
    %1581 = vmatmul.f32.gmra.mxu0 %v1437
    %v1582 = vpop.f32.mrf.mxu0
    %v1583 = vadd.f32 0.0, %v1582
    %1584 = vdwg.mxu0
    %v1589 = vrot.slane %v1543, 7
    %v1590 = vrot.slane %v1563, 6
    %v1591 = vrot.slane %v1583, 5
    %v1592 = vsel %vm413, %v1523, %v1589
    %v1593 = vsel %vm415, %v1590, %v1591
    %v1594 = vsel %vm417, %v1592, %v1593
    %v1596 = vadd.f32 %v1440, %v1594
    %v1597 = vxor.u32 %v1596, 2147483648
    %v1598 = vmul.f32 %v1597, 1.442695
    %v1599 = vpow.pop %v1598
    %v1600 = vadd.f32 %v1599, 1.0
    %v1601 = vrcp.pop %v1600
    %v1602 = vmul.f32 %v1600, %v1601
    %v1603 = vsub.f32 1.0, %v1602
    %v1604 = vmul.f32 %v1601, %v1603
    %v1605 = vadd.f32 %v1601, %v1604
    %vm1606 = vweird.f32 %v1600
    %vm1607 = vweird.f32 %v1601
    %vm1608 = vmor %vm1606, %vm1607
    %v1609 = vsel %vm1608, %v1601, %v1605
    %v1610 = vand.u32 2147483647, %v1600
    %vm1611 = vcmp.eq.f32.partialorder %v1610, 8.507059e+37
    %v1612 = vand.u32 %v1600, 2147483648
    %v1613 = vor.u32 1.1754944e-38, %v1612
    %v1614 = vsel %vm1611, %v1613, %v1609
    %v1615 = vmul.f32 1.0, %v1614
    %v1617 = vrot.slane %v1596, 3
    %v1619 = vtanh.pop %v1617
    %v1621 = vrot.slane %v1615, 1
    %v1623 = vmul.f32 %v1621, %v1438
    %v1624 = vmul.f32 %v1615, %v1619
    %v1625 = vadd.f32 %v1623, %v1624
    %v1626 = vtanh.pop %v1625
    %v1627 = vrot.slane %v1615, 2
    %v1629 = vmul.f32 %v1627, %v1626
    %1630 = vst [vmem:[#allocation5] sm:$0x1] %v1625
    %1631 = vst [vmem:[#allocation4] sm:$0x1] %v1629
    %1632 = vst [vmem:[#allocation3 + $0x6] sm:$0x1] %v1629
    %v1633 = vld [vmem:[#allocation4] sm:$0x1]
    %v1634 = vld [vmem:[#allocation5] sm:$0x1]
    %s1635 = scalar_lea.vmem [#allocation2], 7
    %v1636 = vld [vmem:[%s1635] ss:$8 sm:$0xf]
    %v1637 = vld [vmem:[#allocation11] sm:$0xff]
    %v1638 = vld [vmem:[#allocation11 + $0x8] sm:$0xff]
    %v1639 = vld [vmem:[#allocation11 + $0x10] sm:$0xff]
    %v1640 = vld [vmem:[#allocation11 + $0x18] sm:$0xff]
    %v1641 = vld [vmem:[#allocation11 + $0x20] sm:$0xff]
    %v1642 = vld [vmem:[#allocation11 + $0x28] sm:$0xff]
    %v1643 = vld [vmem:[#allocation11 + $0x30] sm:$0xff]
    %v1644 = vld [vmem:[#allocation11 + $0x38] sm:$0xff]
    %v1645 = vld [vmem:[#allocation11 + $0x40] sm:$0xff]
    %v1646 = vld [vmem:[#allocation11 + $0x48] sm:$0xff]
    %v1647 = vld [vmem:[#allocation11 + $0x50] sm:$0xff]
    %v1648 = vld [vmem:[#allocation11 + $0x58] sm:$0xff]
    %v1649 = vld [vmem:[#allocation11 + $0x60] sm:$0xff]
    %v1650 = vld [vmem:[#allocation11 + $0x68] sm:$0xff]
    %v1651 = vld [vmem:[#allocation11 + $0x70] sm:$0xff]
    %v1652 = vld [vmem:[#allocation11 + $0x78] sm:$0xff]
    %v1653 = vld [vmem:[#allocation11 + $0x80] sm:$0xff]
    %v1654 = vld [vmem:[#allocation11 + $0x88] sm:$0xff]
    %v1655 = vld [vmem:[#allocation11 + $0x90] sm:$0xff]
    %v1656 = vld [vmem:[#allocation11 + $0x98] sm:$0xff]
    %v1657 = vld [vmem:[#allocation11 + $0xa0] sm:$0xff]
    %v1658 = vld [vmem:[#allocation11 + $0xa8] sm:$0xff]
    %v1659 = vld [vmem:[#allocation11 + $0xb0] sm:$0xff]
    %v1660 = vld [vmem:[#allocation11 + $0xb8] sm:$0xff]
    %v1661 = vld [vmem:[#allocation11 + $0xc0] sm:$0xff]
    %v1662 = vld [vmem:[#allocation11 + $0xc8] sm:$0xff]
    %v1663 = vld [vmem:[#allocation11 + $0xd0] sm:$0xff]
    %v1664 = vld [vmem:[#allocation11 + $0xd8] sm:$0xff]
    %v1665 = vld [vmem:[#allocation11 + $0xe0] sm:$0xff]
    %v1666 = vld [vmem:[#allocation11 + $0xe8] sm:$0xff]
    %v1667 = vld [vmem:[#allocation11 + $0xf0] sm:$0xff]
    %v1668 = vld [vmem:[#allocation11 + $0xf8] sm:$0xff]
    %v1669 = vld [vmem:[#allocation11 + $0x100] sm:$0xff]
    %v1670 = vld [vmem:[#allocation11 + $0x108] sm:$0xff]
    %v1671 = vld [vmem:[#allocation11 + $0x110] sm:$0xff]
    %v1672 = vld [vmem:[#allocation11 + $0x118] sm:$0xff]
    %v1673 = vld [vmem:[#allocation11 + $0x120] sm:$0xff]
    %v1674 = vld [vmem:[#allocation11 + $0x128] sm:$0xff]
    %v1675 = vld [vmem:[#allocation11 + $0x130] sm:$0xff]
    %v1676 = vld [vmem:[#allocation11 + $0x138] sm:$0xff]
    %v1677 = vld [vmem:[#allocation11 + $0x140] sm:$0xff]
    %v1678 = vld [vmem:[#allocation11 + $0x148] sm:$0xff]
    %v1679 = vld [vmem:[#allocation11 + $0x150] sm:$0xff]
    %v1680 = vld [vmem:[#allocation11 + $0x158] sm:$0xff]
    %v1681 = vld [vmem:[#allocation11 + $0x160] sm:$0xff]
    %v1682 = vld [vmem:[#allocation11 + $0x168] sm:$0xff]
    %v1683 = vld [vmem:[#allocation11 + $0x170] sm:$0xff]
    %v1684 = vld [vmem:[#allocation11 + $0x178] sm:$0xff]
    %v1685 = vld [vmem:[#allocation11 + $0x180] sm:$0xff]
    %v1686 = vld [vmem:[#allocation11 + $0x188] sm:$0xff]
    %v1687 = vld [vmem:[#allocation11 + $0x190] sm:$0xff]
    %v1688 = vld [vmem:[#allocation11 + $0x198] sm:$0xff]
    %v1689 = vld [vmem:[#allocation11 + $0x1a0] sm:$0xff]
    %v1690 = vld [vmem:[#allocation11 + $0x1a8] sm:$0xff]
    %v1691 = vld [vmem:[#allocation11 + $0x1b0] sm:$0xff]
    %v1692 = vld [vmem:[#allocation11 + $0x1b8] sm:$0xff]
    %v1693 = vld [vmem:[#allocation11 + $0x1c0] sm:$0xff]
    %v1694 = vld [vmem:[#allocation11 + $0x1c8] sm:$0xff]
    %v1695 = vld [vmem:[#allocation11 + $0x1d0] sm:$0xff]
    %v1696 = vld [vmem:[#allocation11 + $0x1d8] sm:$0xff]
    %v1697 = vld [vmem:[#allocation11 + $0x1e0] sm:$0xff]
    %v1698 = vld [vmem:[#allocation11 + $0x1e8] sm:$0xff]
    %v1699 = vld [vmem:[#allocation11 + $0x1f0] sm:$0xff]
    %v1700 = vld [vmem:[#allocation11 + $0x1f8] sm:$0xff]
    %1701 = vmatpush.msra.mxu0 %v1697
    %1702 = vmatpush.msra.mxu0 %v1693
    %1703 = vmatpush.msra.mxu0 %v1689
    %1704 = vmatpush.msra.mxu0 %v1685
    %1705 = vmatpush.msra.mxu0 %v1681
    %1706 = vmatpush.msra.mxu0 %v1677
    %1707 = vmatpush.msra.mxu0 %v1673
    %1708 = vmatpush.msra.mxu0 %v1669
    %1709 = vmatpush.msra.mxu0 %v1665
    %1710 = vmatpush.msra.mxu0 %v1661
    %1711 = vmatpush.msra.mxu0 %v1657
    %1712 = vmatpush.msra.mxu0 %v1653
    %1713 = vmatpush.msra.mxu0 %v1649
    %1714 = vmatpush.msra.mxu0 %v1645
    %1715 = vmatpush.msra.mxu0 %v1641
    %1716 = vmatpush.msra.mxu0 %v1637
    %1717 = vmatmul.f32.gmra.mxu0 %v1633
    %v1718 = vpop.f32.mrf.mxu0
    %v1719 = vadd.f32 0.0, %v1718
    %1720 = vdwg.mxu0
    %1721 = vmatpush.msra.mxu0 %v1698
    %1722 = vmatpush.msra.mxu0 %v1694
    %1723 = vmatpush.msra.mxu0 %v1690
    %1724 = vmatpush.msra.mxu0 %v1686
    %1725 = vmatpush.msra.mxu0 %v1682
    %1726 = vmatpush.msra.mxu0 %v1678
    %1727 = vmatpush.msra.mxu0 %v1674
    %1728 = vmatpush.msra.mxu0 %v1670
    %1729 = vmatpush.msra.mxu0 %v1666
    %1730 = vmatpush.msra.mxu0 %v1662
    %1731 = vmatpush.msra.mxu0 %v1658
    %1732 = vmatpush.msra.mxu0 %v1654
    %1733 = vmatpush.msra.mxu0 %v1650
    %1734 = vmatpush.msra.mxu0 %v1646
    %1735 = vmatpush.msra.mxu0 %v1642
    %1736 = vmatpush.msra.mxu0 %v1638
    %1737 = vmatmul.f32.gmra.mxu0 %v1633
    %v1738 = vpop.f32.mrf.mxu0
    %v1739 = vadd.f32 0.0, %v1738
    %1740 = vdwg.mxu0
    %1741 = vmatpush.msra.mxu0 %v1699
    %1742 = vmatpush.msra.mxu0 %v1695
    %1743 = vmatpush.msra.mxu0 %v1691
    %1744 = vmatpush.msra.mxu0 %v1687
    %1745 = vmatpush.msra.mxu0 %v1683
    %1746 = vmatpush.msra.mxu0 %v1679
    %1747 = vmatpush.msra.mxu0 %v1675
    %1748 = vmatpush.msra.mxu0 %v1671
    %1749 = vmatpush.msra.mxu0 %v1667
    %1750 = vmatpush.msra.mxu0 %v1663
    %1751 = vmatpush.msra.mxu0 %v1659
    %1752 = vmatpush.msra.mxu0 %v1655
    %1753 = vmatpush.msra.mxu0 %v1651
    %1754 = vmatpush.msra.mxu0 %v1647
    %1755 = vmatpush.msra.mxu0 %v1643
    %1756 = vmatpush.msra.mxu0 %v1639
    %1757 = vmatmul.f32.gmra.mxu0 %v1633
    %v1758 = vpop.f32.mrf.mxu0
    %v1759 = vadd.f32 0.0, %v1758
    %1760 = vdwg.mxu0
    %1761 = vmatpush.msra.mxu0 %v1700
    %1762 = vmatpush.msra.mxu0 %v1696
    %1763 = vmatpush.msra.mxu0 %v1692
    %1764 = vmatpush.msra.mxu0 %v1688
    %1765 = vmatpush.msra.mxu0 %v1684
    %1766 = vmatpush.msra.mxu0 %v1680
    %1767 = vmatpush.msra.mxu0 %v1676
    %1768 = vmatpush.msra.mxu0 %v1672
    %1769 = vmatpush.msra.mxu0 %v1668
    %1770 = vmatpush.msra.mxu0 %v1664
    %1771 = vmatpush.msra.mxu0 %v1660
    %1772 = vmatpush.msra.mxu0 %v1656
    %1773 = vmatpush.msra.mxu0 %v1652
    %1774 = vmatpush.msra.mxu0 %v1648
    %1775 = vmatpush.msra.mxu0 %v1644
    %1776 = vmatpush.msra.mxu0 %v1640
    %1777 = vmatmul.f32.gmra.mxu0 %v1633
    %v1778 = vpop.f32.mrf.mxu0
    %v1779 = vadd.f32 0.0, %v1778
    %1780 = vdwg.mxu0
    %v1785 = vrot.slane %v1739, 7
    %v1786 = vrot.slane %v1759, 6
    %v1787 = vrot.slane %v1779, 5
    %v1788 = vsel %vm413, %v1719, %v1785
    %v1789 = vsel %vm415, %v1786, %v1787
    %v1790 = vsel %vm417, %v1788, %v1789
    %v1792 = vadd.f32 %v1636, %v1790
    %v1793 = vxor.u32 %v1792, 2147483648
    %v1794 = vmul.f32 %v1793, 1.442695
    %v1795 = vpow.pop %v1794
    %v1796 = vadd.f32 %v1795, 1.0
    %v1797 = vrcp.pop %v1796
    %v1798 = vmul.f32 %v1796, %v1797
    %v1799 = vsub.f32 1.0, %v1798
    %v1800 = vmul.f32 %v1797, %v1799
    %v1801 = vadd.f32 %v1797, %v1800
    %vm1802 = vweird.f32 %v1796
    %vm1803 = vweird.f32 %v1797
    %vm1804 = vmor %vm1802, %vm1803
    %v1805 = vsel %vm1804, %v1797, %v1801
    %v1806 = vand.u32 2147483647, %v1796
    %vm1807 = vcmp.eq.f32.partialorder %v1806, 8.507059e+37
    %v1808 = vand.u32 %v1796, 2147483648
    %v1809 = vor.u32 1.1754944e-38, %v1808
    %v1810 = vsel %vm1807, %v1809, %v1805
    %v1811 = vmul.f32 1.0, %v1810
    %v1813 = vrot.slane %v1792, 3
    %v1815 = vtanh.pop %v1813
    %v1817 = vrot.slane %v1811, 1
    %v1819 = vmul.f32 %v1817, %v1634
    %v1820 = vmul.f32 %v1811, %v1815
    %v1821 = vadd.f32 %v1819, %v1820
    %v1822 = vtanh.pop %v1821
    %v1823 = vrot.slane %v1811, 2
    %v1825 = vmul.f32 %v1823, %v1822
    %1826 = vst [vmem:[#allocation5] sm:$0x1] %v1821
    %1827 = vst [vmem:[#allocation4] sm:$0x1] %v1825
    %1828 = vst [vmem:[#allocation3 + $0x7] sm:$0x1] %v1825
    %v1829 = vld [vmem:[#allocation3] sm:$0xff]
    %v1830 = vld [vmem:[#allocation14] sm:$0xff]
    %v1831 = vld [vmem:[#allocation14 + $0x8] sm:$0xff]
    %v1832 = vld [vmem:[#allocation14 + $0x10] sm:$0xff]
    %v1833 = vld [vmem:[#allocation14 + $0x18] sm:$0xff]
    %v1834 = vld [vmem:[#allocation14 + $0x20] sm:$0xff]
    %v1835 = vld [vmem:[#allocation14 + $0x28] sm:$0xff]
    %v1836 = vld [vmem:[#allocation14 + $0x30] sm:$0xff]
    %v1837 = vld [vmem:[#allocation14 + $0x38] sm:$0xff]
    %v1838 = vld [vmem:[#allocation14 + $0x40] sm:$0xff]
    %v1839 = vld [vmem:[#allocation14 + $0x48] sm:$0xff]
    %v1840 = vld [vmem:[#allocation14 + $0x50] sm:$0xff]
    %v1841 = vld [vmem:[#allocation14 + $0x58] sm:$0xff]
    %v1842 = vld [vmem:[#allocation14 + $0x60] sm:$0xff]
    %v1843 = vld [vmem:[#allocation14 + $0x68] sm:$0xff]
    %v1844 = vld [vmem:[#allocation14 + $0x70] sm:$0xff]
    %v1845 = vld [vmem:[#allocation14 + $0x78] sm:$0xff]
    %v1846 = vld [vmem:[%s5] sm:$0x1]
    %v1848 = vperm.slane %v1846, 0
    %1850 = vmatpush.msra.mxu0 %v1845
    %1851 = vmatpush.msra.mxu0 %v1844
    %1852 = vmatpush.msra.mxu0 %v1843
    %1853 = vmatpush.msra.mxu0 %v1842
    %1854 = vmatpush.msra.mxu0 %v1841
    %1855 = vmatpush.msra.mxu0 %v1840
    %1856 = vmatpush.msra.mxu0 %v1839
    %1857 = vmatpush.msra.mxu0 %v1838
    %1858 = vmatpush.msra.mxu0 %v1837
    %1859 = vmatpush.msra.mxu0 %v1836
    %1860 = vmatpush.msra.mxu0 %v1835
    %1861 = vmatpush.msra.mxu0 %v1834
    %1862 = vmatpush.msra.mxu0 %v1833
    %1863 = vmatpush.msra.mxu0 %v1832
    %1864 = vmatpush.msra.mxu0 %v1831
    %1865 = vmatpush.msra.mxu0 %v1830
    %1866 = vmatmul.f32.gmra.mxu0 %v1829
    %v1867 = vpop.f32.mrf.mxu0
    %v1868 = vadd.f32 %v1848, %v1867
    %1869 = vdwg.mxu0
    %1870 = vst [vmem:[#allocation15] sm:$0xff] %v1868
    // Predicated region
    $region46: #{tpu_custom_call.1} parent=1 // pred_check
      _
    $region47: #{tpu_custom_call.1} parent=1 // pred_check_branch
      %1872 = sbr.rel (0) target = $region49
    $region48: #{tpu_custom_call.1} parent=1 // pred_region
      %1874 = vsyncadd [#allocation8], 0
      %s1876 = sshll.u32 [#allocation15], 4
      %s1877 = int_to_ptr.vmem [resolvable:$true] %s1876
      %s1878 = sshll.u32 %s6, 4
      %s1879 = int_to_ptr.hbm [resolvable:$true] %s1878
      %1881 = dma.vmem_to_hbm [thread:$0]  %s1877, 128, %s1879, [#allocation8]
    $region49: #{tpu_custom_call.1} parent=1 // pred_fallthru
      _
    // Predicated region
    $region50: #{tpu_custom_call.1} parent=1 // pred_check
      _
    $region51: #{tpu_custom_call.1} parent=1 // pred_check_branch
      %1883 = sbr.rel (0) target = $region53
    $region52: #{tpu_custom_call.1} parent=1 // pred_region
      %1885 = dma.done [#allocation8], 128
    $region53: #{tpu_custom_call.1} parent=1 // pred_fallthru
      _
    %1886 = vsyncpa [#allocation7], 1
    %1887 = vsyncpa [#allocation10], 1
    %1888 = vsyncpa [#allocation13], 1
    %1889 = vsyncpa [#allocation8], 1

</llo_original>
